<compile_context>
chip_gen: v5e
topology: v5e:2x2
jax: 0.10.0
libtpu: 0.0.40
codegen_flags: <defaults>
</compile_context>

<pallas_src>
import functools

import numpy as np
import jax
import jax.numpy as jnp
from jax import lax
from jax.experimental import pallas as pl
from jax.experimental.pallas import tpu as pltpu

# ---- Stage1Assigner hyper-parameters (from the module __init__) -------------
T_LOW = 0.3
T_HIGH = 0.7
MAX_K = 4
BATCH_SIZE_PER_IMAGE = 256
POSITIVE_FRACTION = 0.5

LANE = 128      # TPU lane width
SUBLANE = 8     # TPU sublane width


# ----------------------------- Pallas kernel ---------------------------------
def _make_assigner_kernel(a_real, t_low, t_high, max_k):
    """a_real: number of real (un-padded) anchors, closed over at trace time."""

    def kernel(num_gt_ref, gt_ref, anc_ref,
               labels_ref, midx_ref, mval_ref, topv_ref, topi_ref):
        b = pl.program_id(0)
        g = num_gt_ref[b]                                   # number of real GTs (SMEM scalar)

        # GT boxes (xyxy), one per sublane row -> [G_PAD, 1] columns.
        gx1 = gt_ref[:, 0:1]
        gy1 = gt_ref[:, 1:2]
        gx2 = gt_ref[:, 2:3]
        gy2 = gt_ref[:, 3:4]
        garea = (gx2 - gx1) * (gy2 - gy1)                   # [G_PAD, 1]

        # Anchors (cxcywh, coordinate-major) -> xyxy rows [1, A_PAD].
        acx = anc_ref[0:1, :]
        acy = anc_ref[1:2, :]
        aw = anc_ref[2:3, :]
        ah = anc_ref[3:4, :]
        ax1 = acx - 0.5 * aw
        ay1 = acy - 0.5 * ah
        ax2 = acx + 0.5 * aw
        ay2 = acy + 0.5 * ah
        aarea = (ax2 - ax1) * (ay2 - ay1)                   # [1, A_PAD]

        # Pairwise IoU [G_PAD, A_PAD] (lives only in VMEM/vregs, never hits HBM).
        w = jnp.maximum(jnp.minimum(gx2, ax2) - jnp.maximum(gx1, ax1), 0.0)
        h = jnp.maximum(jnp.minimum(gy2, ay2) - jnp.maximum(gy1, ay1), 0.0)
        inter = w * h
        union = jnp.maximum(garea + aarea - inter, 1e-9)
        iou = inter * pl.reciprocal(union, approx=False)    # exact: keep threshold/tie parity

        g_pad, a_pad = iou.shape
        row = lax.broadcasted_iota(jnp.int32, iou.shape, 0)
        lane = lax.broadcasted_iota(jnp.int32, iou.shape, 1)
        valid = (row < g) & (lane < a_real)                 # mask padded GT rows / anchor lanes
        iou_m = jnp.where(valid, iou, -1.0)

        # Per-anchor best GT (max + first-index argmax over valid GT rows).
        mval = jnp.max(iou_m, axis=0, keepdims=True)                              # [1, A_PAD]
        midx = jnp.min(jnp.where(iou_m == mval, row, g_pad), axis=0, keepdims=True)
        mval_ref[...] = mval
        midx_ref[...] = midx

        # allow_low_quality_matches: anchors achieving a GT's best IoU.
        gtmax = jnp.max(iou_m, axis=1, keepdims=True)                             # [G_PAD, 1]
        hit = (row < g) & (iou_m == gtmax)
        lowq = jnp.max(jnp.where(hit, jnp.int32(1), jnp.int32(0)),
                       axis=0, keepdims=True) > 0                                 # [1, A_PAD]

        # Matcher(thresholds=[t_low, t_high], labels=[0, -1, 1]) + low-quality override.
        labels = jnp.full(mval.shape, -1, jnp.int32)
        labels = jnp.where(mval < t_low, jnp.int32(0), labels)
        labels = jnp.where(mval >= t_high, jnp.int32(1), labels)
        labels = jnp.where(lowq, jnp.int32(1), labels)
        labels_ref[...] = labels

        # Per-GT top-k anchors over the FULL anchor axis (descending IoU,
        # smallest-index tie-break), written lane-dense (only lanes [0, max_k) used).
        lanes_out = topv_ref.shape[1]                        # 128
        col = lax.broadcasted_iota(jnp.int32, (g_pad, lanes_out), 1)
        topv = jnp.full((g_pad, lanes_out), -1.0, jnp.float32)
        topi = jnp.zeros((g_pad, lanes_out), jnp.int32)
        work = iou_m
        for kk in range(max_k):                              # static, tiny unroll
            v = jnp.max(work, axis=1, keepdims=True)                              # [G_PAD, 1]
            idx = jnp.min(jnp.where(work == v, lane, a_pad), axis=1, keepdims=True)
            topv = jnp.where(col == kk, v, topv)
            topi = jnp.where(col == kk, idx, topi)
            work = jnp.where(lane == idx, -2.0, work)        # knock out the chosen anchor
        topv_ref[...] = topv
        topi_ref[...] = topi

    return kernel


@functools.partial(jax.jit, static_argnames=("a_real",))
def stage1_match_batched(num_gt, gt_pad_xyxy, anchors_t, *, a_real):
    """num_gt: [bs] i32; gt_pad_xyxy: [bs, G_PAD, 4] f32 (xyxy);
    anchors_t: [bs, 4, A_PAD] f32 (cxcywh, coordinate-major)."""
    bs, g_pad, _ = gt_pad_xyxy.shape
    a_pad = anchors_t.shape[2]
    assert a_pad % LANE == 0 and g_pad % SUBLANE == 0
    # TODO(synk): for very large anchor counts (G_PAD*A_PAD*4B approaching the scoped
    # VMEM limit, esp. v7x 64 MiB), tile the anchor axis and merge per-tile top-k /
    # gtmax in VMEM scratch instead of a single full-A block.
    kernel = _make_assigner_kernel(a_real, T_LOW, T_HIGH, MAX_K)
    return pl.pallas_call(
        kernel,
        out_shape=(
            jax.ShapeDtypeStruct((bs, 1, a_pad), jnp.int32),      # matcher labels (-1/0/1)
            jax.ShapeDtypeStruct((bs, 1, a_pad), jnp.int32),      # matched gt index per anchor
            jax.ShapeDtypeStruct((bs, 1, a_pad), jnp.float32),    # matched IoU per anchor
            jax.ShapeDtypeStruct((bs, g_pad, LANE), jnp.float32), # top-k IoU per GT
            jax.ShapeDtypeStruct((bs, g_pad, LANE), jnp.int32),   # top-k anchor idx per GT
        ),
        grid_spec=pltpu.PrefetchScalarGridSpec(
            num_scalar_prefetch=1,
            grid=(bs,),
            in_specs=[
                pl.BlockSpec((None, g_pad, 4), lambda b, ng: (b, 0, 0)),
                pl.BlockSpec((None, 4, a_pad), lambda b, ng: (b, 0, 0)),
            ],
            out_specs=[
                pl.BlockSpec((None, 1, a_pad), lambda b, ng: (b, 0, 0)),
                pl.BlockSpec((None, 1, a_pad), lambda b, ng: (b, 0, 0)),
                pl.BlockSpec((None, 1, a_pad), lambda b, ng: (b, 0, 0)),
                pl.BlockSpec((None, g_pad, LANE), lambda b, ng: (b, 0, 0)),
                pl.BlockSpec((None, g_pad, LANE), lambda b, ng: (b, 0, 0)),
            ],
        ),
        compiler_params=pltpu.CompilerParams(
            dimension_semantics=("parallel",)),               # no carry -> v7x both cores
    )(num_gt, gt_pad_xyxy, anchors_t)


# ----------------------------- host-side glue --------------------------------
def box_cxcywh_to_xyxy_np(b):
    cx, cy, w, h = b[:, 0], b[:, 1], b[:, 2], b[:, 3]
    return np.stack([cx - 0.5 * w, cy - 0.5 * h, cx + 0.5 * w, cy + 0.5 * h],
                    axis=1).astype(np.float32)


def _pack_inputs(outputs, targets):
    anchors_all = np.asarray(outputs["anchors"], dtype=np.float32)    # [bs, A, 4] cxcywh
    bs, a, _ = anchors_all.shape
    a_pad = ((a + LANE - 1) // LANE) * LANE
    max_g = max((int(np.asarray(t["boxes"]).reshape(-1, 4).shape[0]) for t in targets),
                default=0)
    g_pad = max(SUBLANE, ((max_g + SUBLANE - 1) // SUBLANE) * SUBLANE)

    gt_pad = np.zeros((bs, g_pad, 4), np.float32)
    num_gt = np.zeros((bs,), np.int32)
    for b in range(bs):
        boxes = np.asarray(targets[b]["boxes"], dtype=np.float32).reshape(-1, 4)
        g = boxes.shape[0]
        if g:
            gt_pad[b, :g] = box_cxcywh_to_xyxy_np(boxes)
        num_gt[b] = g

    anchors_t = np.zeros((bs, 4, a_pad), np.float32)
    anchors_t[:, :, :a] = np.transpose(anchors_all, (0, 2, 1))
    return num_gt, gt_pad, anchors_t, a


def sample_topk_per_gt_np(pr_inds, gt_inds, topk_anchor_idx, k):
    """Same semantics as detrex sample_topk_per_gt, consuming the per-GT top-k anchor
    indices (over the full anchor set) computed on-device."""
    if len(gt_inds) == 0:
        return pr_inds, gt_inds
    gt_inds2, counts = np.unique(gt_inds, return_counts=True)
    pr3, gt3 = [], []
    for g, c in zip(gt_inds2, counts):
        c = min(int(c), k)
        pr3.append(topk_anchor_idx[int(g), :c].astype(np.int64))
        gt3.append(np.full(c, g, dtype=np.int64))
    return np.concatenate(pr3), np.concatenate(gt3)


def stage1_assigner_forward(outputs, targets, rng):
    bs = len(targets)
    if bs == 0:
        return []
    num_gt, gt_pad, anchors_t, a = _pack_inputs(outputs, targets)
    labels_k, midx_k, _, _, topi_k = jax.block_until_ready(
        stage1_match_batched(jnp.asarray(num_gt), jnp.asarray(gt_pad),
                             jnp.asarray(anchors_t), a_real=a))
    labels_k = np.asarray(labels_k)[:, 0, :a]
    midx_k = np.asarray(midx_k)[:, 0, :a].astype(np.int64)
    topi_k = np.asarray(topi_k)

    indices = []
    for b in range(bs):
        g = int(num_gt[b])
        if g == 0:
            indices.append((np.array([], dtype=np.int64), np.array([], dtype=np.int64)))
            continue

        # _subsample_labels(batch_size_per_image=256, positive_fraction=0.5, bg=0)
        labels = labels_k[b]
        pos = np.nonzero(labels == 1)[0]
        neg = np.nonzero(labels == 0)[0]
        num_pos = min(len(pos), int(BATCH_SIZE_PER_IMAGE * POSITIVE_FRACTION))
        num_neg = min(len(neg), BATCH_SIZE_PER_IMAGE - num_pos)
        # TODO(synk): torch.randperm stream is not reproducible in numpy; a seeded
        # permutation gives the same random-subset semantics.
        pos_idx = rng.permutation(pos)[:num_pos]
        neg_idx = rng.permutation(neg)[:num_neg]
        final = np.full(a, -1, dtype=np.int64)
        final[pos_idx] = 1
        final[neg_idx] = 0

        pos_pr_inds = np.nonzero(final == 1)[0].astype(np.int64)
        pos_gt_inds = midx_k[b][pos_pr_inds]
        pos_pr_inds, pos_gt_inds = sample_topk_per_gt_np(
            pos_pr_inds, pos_gt_inds, topi_k[b], MAX_K)
        indices.append((pos_pr_inds, pos_gt_inds))
    return indices


# ------------------------------ sanity check ----------------------------------
def _check_against_numpy(anchors, boxes, labels_k, midx_k, mval_k, topv_k, topi_k):
    a = anchors.shape[0]
    g = boxes.shape[0]
    g_xyxy = box_cxcywh_to_xyxy_np(boxes)
    a_xyxy = box_cxcywh_to_xyxy_np(anchors)
    iw = np.maximum(np.minimum(g_xyxy[:, None, 2], a_xyxy[None, :, 2]) -
                    np.maximum(g_xyxy[:, None, 0], a_xyxy[None, :, 0]), 0.0)
    ih = np.maximum(np.minimum(g_xyxy[:, None, 3], a_xyxy[None, :, 3]) -
                    np.maximum(g_xyxy[:, None, 1], a_xyxy[None, :, 1]), 0.0)
    inter = iw * ih
    area_g = (g_xyxy[:, 2] - g_xyxy[:, 0]) * (g_xyxy[:, 3] - g_xyxy[:, 1])
    area_a = (a_xyxy[:, 2] - a_xyxy[:, 0]) * (a_xyxy[:, 3] - a_xyxy[:, 1])
    iou = inter / np.maximum(area_g[:, None] + area_a[None, :] - inter, 1e-9)

    mval_ref = iou.max(axis=0)
    assert np.allclose(mval_k, mval_ref, atol=1e-5), "per-anchor max IoU mismatch"

    midx_ref = iou.argmax(axis=0)
    gap = (np.sort(iou, axis=0)[-1] - np.sort(iou, axis=0)[-2]) if g >= 2 else np.ones(a)
    assert np.all((midx_k == midx_ref) | (gap < 1e-6)), "per-anchor argmax mismatch"

    gtmax_ref = iou.max(axis=1)
    lab_ref = np.full(a, -1, np.int64)
    lab_ref[mval_ref < T_LOW] = 0
    lab_ref[mval_ref >= T_HIGH] = 1
    lab_ref[np.any(iou == gtmax_ref[:, None], axis=0)] = 1
    near_thr = (np.abs(mval_ref - T_LOW) < 1e-4) | (np.abs(mval_ref - T_HIGH) < 1e-4)
    near_max = np.any(np.abs(iou - gtmax_ref[:, None]) < 1e-4, axis=0)
    assert np.all((labels_k == lab_ref) | near_thr | near_max), "labels mismatch"

    topv_ref = -np.sort(-iou, axis=1)[:, :MAX_K]
    assert np.allclose(topv_k[:g, :MAX_K], topv_ref, atol=1e-5), "top-k values mismatch"
    picked = np.take_along_axis(iou, topi_k[:g, :MAX_K].astype(np.int64), axis=1)
    assert np.allclose(picked, topv_ref, atol=1e-5), "top-k indices mismatch"


# ------------------------------------ main ------------------------------------
if __name__ == "__main__":
    key = jax.random.PRNGKey(0)
    bs, A = 2, 1000                      # A deliberately not a multiple of 128 (exercises padding)
    k1, k2, k3 = jax.random.split(key, 3)

    # anchors: cxcywh in [0, 1]
    anc_cxcy = jax.random.uniform(k1, (bs, A, 2), minval=0.05, maxval=0.95)
    anc_wh = jax.random.uniform(k2, (bs, A, 2), minval=0.05, maxval=0.30)
    anchors = np.asarray(jnp.concatenate([anc_cxcy, anc_wh], axis=-1), dtype=np.float32)
    outputs = {"anchors": anchors}

    num_gt_list = [3, 5]
    targets = []
    gkeys = jax.random.split(k3, bs)
    for b in range(bs):
        kk1, kk2 = jax.random.split(gkeys[b])
        cxcy = jax.random.uniform(kk1, (num_gt_list[b], 2), minval=0.1, maxval=0.9)
        wh = jax.random.uniform(kk2, (num_gt_list[b], 2), minval=0.05, maxval=0.3)
        targets.append({"boxes": np.asarray(jnp.concatenate([cxcy, wh], axis=-1),
                                            dtype=np.float32)})

    # --- run the batched kernel once and check against a numpy reference ---
    num_gt, gt_pad, anchors_t, a_real = _pack_inputs(outputs, targets)
    outs = jax.block_until_ready(
        stage1_match_batched(jnp.asarray(num_gt), jnp.asarray(gt_pad),
                             jnp.asarray(anchors_t), a_real=a_real))
    labels_k, midx_k, mval_k, topv_k, topi_k = [np.asarray(o) for o in outs]
    for b in range(bs):
        _check_against_numpy(anchors[b], targets[b]["boxes"],
                             labels_k[b, 0, :A], midx_k[b, 0, :A], mval_k[b, 0, :A],
                             topv_k[b], topi_k[b])

    # --- full Stage1Assigner forward (kernel result is reused from the jit cache) ---
    rng = np.random.default_rng(0)
    indices = stage1_assigner_forward(outputs, targets, rng)
    for bb, (pr, gt) in enumerate(indices):
        assert pr.shape == gt.shape
        if len(pr):
            assert pr.max() < A and gt.min() >= 0 and gt.max() < num_gt_list[bb]

    print("KERNEL_OK")
</pallas_src>

<mosaic_0001>
module attributes {stable_mosaic.version = 11 : i64} {
  func.func @kernel(%arg0: i32, %arg1: memref<2xi32, #tpu.memory_space<smem>>, %arg2: memref<1x8x4xf32, #tpu.memory_space<vmem>>, %arg3: memref<1x4x1024xf32, #tpu.memory_space<vmem>>, %arg4: memref<1x1x1024xi32, #tpu.memory_space<vmem>>, %arg5: memref<1x1x1024xi32, #tpu.memory_space<vmem>>, %arg6: memref<1x1x1024xf32, #tpu.memory_space<vmem>>, %arg7: memref<1x8x128xf32, #tpu.memory_space<vmem>>, %arg8: memref<1x8x128xi32, #tpu.memory_space<vmem>>) attributes {dimension_semantics = [#tpu.dimension_semantics<parallel>], iteration_bounds = array<i64: 2>, scalar_prefetch = 1 : i64, scratch_operands = 0 : i64, tpu.core_type = #tpu.core_type<tc>, window_params = [{transform_indices = @transform_0, window_bounds = array<i64: 1, 8, 4>}, {transform_indices = @transform_1, window_bounds = array<i64: 1, 4, 1024>}, {transform_indices = @transform_2, window_bounds = array<i64: 1, 1, 1024>}, {transform_indices = @transform_3, window_bounds = array<i64: 1, 1, 1024>}, {transform_indices = @transform_4, window_bounds = array<i64: 1, 1, 1024>}, {transform_indices = @transform_5, window_bounds = array<i64: 1, 8, 128>}, {transform_indices = @transform_6, window_bounds = array<i64: 1, 8, 128>}]} {
    %0 = arith.index_cast %arg0 : i32 to index
    %1 = memref.load %arg1[%0] : memref<2xi32, #tpu.memory_space<smem>>
    %c0 = arith.constant 0 : index
    %c0_0 = arith.constant 0 : index
    %c0_1 = arith.constant 0 : index
    %2 = vector.load %arg2[%c0, %c0_0, %c0_1] : memref<1x8x4xf32, #tpu.memory_space<vmem>>, vector<1x8x1xf32>
    %3 = vector.shape_cast %2 : vector<1x8x1xf32> to vector<8x1xf32>
    %c0_2 = arith.constant 0 : index
    %c0_3 = arith.constant 0 : index
    %c1 = arith.constant 1 : index
    %4 = vector.load %arg2[%c0_2, %c0_3, %c1] : memref<1x8x4xf32, #tpu.memory_space<vmem>>, vector<1x8x1xf32>
    %5 = vector.shape_cast %4 : vector<1x8x1xf32> to vector<8x1xf32>
    %c0_4 = arith.constant 0 : index
    %c0_5 = arith.constant 0 : index
    %c2 = arith.constant 2 : index
    %6 = vector.load %arg2[%c0_4, %c0_5, %c2] : memref<1x8x4xf32, #tpu.memory_space<vmem>>, vector<1x8x1xf32>
    %7 = vector.shape_cast %6 : vector<1x8x1xf32> to vector<8x1xf32>
    %c0_6 = arith.constant 0 : index
    %c0_7 = arith.constant 0 : index
    %c3 = arith.constant 3 : index
    %8 = vector.load %arg2[%c0_6, %c0_7, %c3] : memref<1x8x4xf32, #tpu.memory_space<vmem>>, vector<1x8x1xf32>
    %9 = vector.shape_cast %8 : vector<1x8x1xf32> to vector<8x1xf32>
    %10 = arith.subf %7, %3 : vector<8x1xf32>
    %11 = arith.subf %9, %5 : vector<8x1xf32>
    %12 = arith.mulf %10, %11 : vector<8x1xf32>
    %c0_8 = arith.constant 0 : index
    %c0_9 = arith.constant 0 : index
    %c0_10 = arith.constant 0 : index
    %13 = vector.load %arg3[%c0_8, %c0_9, %c0_10] : memref<1x4x1024xf32, #tpu.memory_space<vmem>>, vector<1x1x1024xf32>
    %14 = vector.shape_cast %13 : vector<1x1x1024xf32> to vector<1x1024xf32>
    %c0_11 = arith.constant 0 : index
    %c1_12 = arith.constant 1 : index
    %c0_13 = arith.constant 0 : index
    %15 = vector.load %arg3[%c0_11, %c1_12, %c0_13] : memref<1x4x1024xf32, #tpu.memory_space<vmem>>, vector<1x1x1024xf32>
    %16 = vector.shape_cast %15 : vector<1x1x1024xf32> to vector<1x1024xf32>
    %c0_14 = arith.constant 0 : index
    %c2_15 = arith.constant 2 : index
    %c0_16 = arith.constant 0 : index
    %17 = vector.load %arg3[%c0_14, %c2_15, %c0_16] : memref<1x4x1024xf32, #tpu.memory_space<vmem>>, vector<1x1x1024xf32>
    %18 = vector.shape_cast %17 : vector<1x1x1024xf32> to vector<1x1024xf32>
    %c0_17 = arith.constant 0 : index
    %c3_18 = arith.constant 3 : index
    %c0_19 = arith.constant 0 : index
    %19 = vector.load %arg3[%c0_17, %c3_18, %c0_19] : memref<1x4x1024xf32, #tpu.memory_space<vmem>>, vector<1x1x1024xf32>
    %20 = vector.shape_cast %19 : vector<1x1x1024xf32> to vector<1x1024xf32>
    %cst = arith.constant 5.000000e-01 : f32
    %21 = vector.broadcast %cst : f32 to vector<1x1024xf32>
    %22 = arith.mulf %21, %18 : vector<1x1024xf32>
    %23 = arith.subf %14, %22 : vector<1x1024xf32>
    %cst_20 = arith.constant 5.000000e-01 : f32
    %24 = vector.broadcast %cst_20 : f32 to vector<1x1024xf32>
    %25 = arith.mulf %24, %20 : vector<1x1024xf32>
    %26 = arith.subf %16, %25 : vector<1x1024xf32>
    %cst_21 = arith.constant 5.000000e-01 : f32
    %27 = vector.broadcast %cst_21 : f32 to vector<1x1024xf32>
    %28 = arith.mulf %27, %18 : vector<1x1024xf32>
    %29 = arith.addf %14, %28 : vector<1x1024xf32>
    %cst_22 = arith.constant 5.000000e-01 : f32
    %30 = vector.broadcast %cst_22 : f32 to vector<1x1024xf32>
    %31 = arith.mulf %30, %20 : vector<1x1024xf32>
    %32 = arith.addf %16, %31 : vector<1x1024xf32>
    %33 = arith.subf %29, %23 : vector<1x1024xf32>
    %34 = arith.subf %32, %26 : vector<1x1024xf32>
    %35 = arith.mulf %33, %34 : vector<1x1024xf32>
    %36 = vector.broadcast %7 : vector<8x1xf32> to vector<8x1024xf32>
    %37 = vector.broadcast %29 : vector<1x1024xf32> to vector<8x1024xf32>
    %38 = arith.minimumf %36, %37 : vector<8x1024xf32>
    %39 = vector.broadcast %3 : vector<8x1xf32> to vector<8x1024xf32>
    %40 = vector.broadcast %23 : vector<1x1024xf32> to vector<8x1024xf32>
    %41 = arith.maximumf %39, %40 : vector<8x1024xf32>
    %42 = arith.subf %38, %41 : vector<8x1024xf32>
    %cst_23 = arith.constant 0.000000e+00 : f32
    %43 = vector.broadcast %cst_23 : f32 to vector<8x1024xf32>
    %44 = arith.maximumf %42, %43 : vector<8x1024xf32>
    %45 = vector.broadcast %9 : vector<8x1xf32> to vector<8x1024xf32>
    %46 = vector.broadcast %32 : vector<1x1024xf32> to vector<8x1024xf32>
    %47 = arith.minimumf %45, %46 : vector<8x1024xf32>
    %48 = vector.broadcast %5 : vector<8x1xf32> to vector<8x1024xf32>
    %49 = vector.broadcast %26 : vector<1x1024xf32> to vector<8x1024xf32>
    %50 = arith.maximumf %48, %49 : vector<8x1024xf32>
    %51 = arith.subf %47, %50 : vector<8x1024xf32>
    %cst_24 = arith.constant 0.000000e+00 : f32
    %52 = vector.broadcast %cst_24 : f32 to vector<8x1024xf32>
    %53 = arith.maximumf %51, %52 : vector<8x1024xf32>
    %54 = arith.mulf %44, %53 : vector<8x1024xf32>
    %55 = vector.broadcast %12 : vector<8x1xf32> to vector<8x1024xf32>
    %56 = vector.broadcast %35 : vector<1x1024xf32> to vector<8x1024xf32>
    %57 = arith.addf %55, %56 : vector<8x1024xf32>
    %58 = arith.subf %57, %54 : vector<8x1024xf32>
    %cst_25 = arith.constant 9.99999971E-10 : f32
    %59 = vector.broadcast %cst_25 : f32 to vector<8x1024xf32>
    %60 = arith.maximumf %58, %59 : vector<8x1024xf32>
    %61 = tpu.reciprocal %60 : vector<8x1024xf32> -> vector<8x1024xf32>
    %62 = arith.mulf %54, %61 : vector<8x1024xf32>
    %63 = tpu.iota {dimensions = array<i32: 0>} : vector<8x1024xi32>
    %64 = tpu.iota {dimensions = array<i32: 1>} : vector<8x1024xi32>
    %65 = vector.broadcast %1 : i32 to vector<8x1024xi32>
    %66 = arith.cmpi slt, %63, %65 : vector<8x1024xi32>
    %c1000_i32 = arith.constant 1000 : i32
    %67 = vector.broadcast %c1000_i32 : i32 to vector<8x1024xi32>
    %68 = arith.cmpi slt, %64, %67 : vector<8x1024xi32>
    %69 = arith.andi %66, %68 : vector<8x1024xi1>
    %cst_26 = arith.constant -1.000000e+00 : f32
    %70 = vector.broadcast %cst_26 : f32 to vector<8x1024xf32>
    %71 = arith.select %69, %62, %70 : vector<8x1024xi1>, vector<8x1024xf32>
    %cst_27 = arith.constant dense<0xFF800000> : vector<1024xf32>
    %72 = vector.multi_reduction <maximumf>, %71, %cst_27 [0] : vector<8x1024xf32> to vector<1024xf32>
    %73 = vector.shape_cast %72 : vector<1024xf32> to vector<1x1024xf32>
    %74 = vector.broadcast %73 : vector<1x1024xf32> to vector<8x1024xf32>
    %75 = arith.cmpf oeq, %71, %74 : vector<8x1024xf32>
    %c8_i32 = arith.constant 8 : i32
    %76 = vector.broadcast %c8_i32 : i32 to vector<8x1024xi32>
    %77 = arith.select %75, %63, %76 : vector<8x1024xi1>, vector<8x1024xi32>
    %cst_28 = arith.constant dense<2147483647> : vector<1024xi32>
    %78 = vector.multi_reduction <minsi>, %77, %cst_28 [0] : vector<8x1024xi32> to vector<1024xi32>
    %79 = vector.shape_cast %78 : vector<1024xi32> to vector<1x1024xi32>
    %c0_29 = arith.constant 0 : index
    %c0_30 = arith.constant 0 : index
    %c0_31 = arith.constant 0 : index
    %80 = vector.load %arg6[%c0_29, %c0_30, %c0_31] : memref<1x1x1024xf32, #tpu.memory_space<vmem>>, vector<1x1x1024xf32>
    %81 = vector.shape_cast %80 : vector<1x1x1024xf32> to vector<1x1024xf32>
    %82 = vector.shape_cast %73 : vector<1x1024xf32> to vector<1x1x1024xf32>
    tpu.vector_store %arg6[%c0_29, %c0_30, %c0_31], %82 {strides = array<i32>} : memref<1x1x1024xf32, #tpu.memory_space<vmem>>, vector<1x1x1024xf32>,
    %c0_32 = arith.constant 0 : index
    %c0_33 = arith.constant 0 : index
    %c0_34 = arith.constant 0 : index
    %83 = vector.load %arg5[%c0_32, %c0_33, %c0_34] : memref<1x1x1024xi32, #tpu.memory_space<vmem>>, vector<1x1x1024xi32>
    %84 = vector.shape_cast %83 : vector<1x1x1024xi32> to vector<1x1024xi32>
    %85 = vector.shape_cast %79 : vector<1x1024xi32> to vector<1x1x1024xi32>
    tpu.vector_store %arg5[%c0_32, %c0_33, %c0_34], %85 {strides = array<i32>} : memref<1x1x1024xi32, #tpu.memory_space<vmem>>, vector<1x1x1024xi32>,
    %cst_35 = arith.constant dense<0xFF800000> : vector<8xf32>
    %86 = vector.multi_reduction <maximumf>, %71, %cst_35 [1] : vector<8x1024xf32> to vector<8xf32>
    %87 = vector.shape_cast %86 : vector<8xf32> to vector<8x1xf32>
    %88 = vector.broadcast %1 : i32 to vector<8x1024xi32>
    %89 = arith.cmpi slt, %63, %88 : vector<8x1024xi32>
    %90 = vector.broadcast %87 : vector<8x1xf32> to vector<8x1024xf32>
    %91 = arith.cmpf oeq, %71, %90 : vector<8x1024xf32>
    %92 = arith.andi %89, %91 : vector<8x1024xi1>
    %c1_i32 = arith.constant 1 : i32
    %c0_i32 = arith.constant 0 : i32
    %93 = vector.broadcast %c1_i32 : i32 to vector<8x1024xi32>
    %94 = vector.broadcast %c0_i32 : i32 to vector<8x1024xi32>
    %95 = arith.select %92, %93, %94 : vector<8x1024xi1>, vector<8x1024xi32>
    %cst_36 = arith.constant dense<-2147483648> : vector<1024xi32>
    %96 = vector.multi_reduction <maxsi>, %95, %cst_36 [0] : vector<8x1024xi32> to vector<1024xi32>
    %97 = vector.shape_cast %96 : vector<1024xi32> to vector<1x1024xi32>
    %c0_i32_37 = arith.constant 0 : i32
    %98 = vector.broadcast %c0_i32_37 : i32 to vector<1x1024xi32>
    %99 = arith.cmpi sgt, %97, %98 : vector<1x1024xi32>
    %c-1_i32 = arith.constant -1 : i32
    %100 = vector.broadcast %c-1_i32 : i32 to vector<1x1024xi32>
    %cst_38 = arith.constant 3.000000e-01 : f32
    %101 = vector.broadcast %cst_38 : f32 to vector<1x1024xf32>
    %102 = arith.cmpf olt, %73, %101 : vector<1x1024xf32>
    %c0_i32_39 = arith.constant 0 : i32
    %103 = vector.broadcast %c0_i32_39 : i32 to vector<1x1024xi32>
    %104 = arith.select %102, %103, %100 : vector<1x1024xi1>, vector<1x1024xi32>
    %cst_40 = arith.constant 0.699999988 : f32
    %105 = vector.broadcast %cst_40 : f32 to vector<1x1024xf32>
    %106 = arith.cmpf oge, %73, %105 : vector<1x1024xf32>
    %c1_i32_41 = arith.constant 1 : i32
    %107 = vector.broadcast %c1_i32_41 : i32 to vector<1x1024xi32>
    %108 = arith.select %106, %107, %104 : vector<1x1024xi1>, vector<1x1024xi32>
    %c1_i32_42 = arith.constant 1 : i32
    %109 = vector.broadcast %c1_i32_42 : i32 to vector<1x1024xi32>
    %110 = arith.select %99, %109, %108 : vector<1x1024xi1>, vector<1x1024xi32>
    %c0_43 = arith.constant 0 : index
    %c0_44 = arith.constant 0 : index
    %c0_45 = arith.constant 0 : index
    %111 = vector.load %arg4[%c0_43, %c0_44, %c0_45] : memref<1x1x1024xi32, #tpu.memory_space<vmem>>, vector<1x1x1024xi32>
    %112 = vector.shape_cast %111 : vector<1x1x1024xi32> to vector<1x1024xi32>
    %113 = vector.shape_cast %110 : vector<1x1024xi32> to vector<1x1x1024xi32>
    tpu.vector_store %arg4[%c0_43, %c0_44, %c0_45], %113 {strides = array<i32>} : memref<1x1x1024xi32, #tpu.memory_space<vmem>>, vector<1x1x1024xi32>,
    %114 = tpu.iota {dimensions = array<i32: 1>} : vector<8x128xi32>
    %cst_46 = arith.constant -1.000000e+00 : f32
    %115 = vector.broadcast %cst_46 : f32 to vector<8x128xf32>
    %c0_i32_47 = arith.constant 0 : i32
    %116 = vector.broadcast %c0_i32_47 : i32 to vector<8x128xi32>
    %cst_48 = arith.constant dense<0xFF800000> : vector<8xf32>
    %117 = vector.multi_reduction <maximumf>, %71, %cst_48 [1] : vector<8x1024xf32> to vector<8xf32>
    %118 = vector.shape_cast %117 : vector<8xf32> to vector<8x1xf32>
    %119 = vector.broadcast %118 : vector<8x1xf32> to vector<8x1024xf32>
    %120 = arith.cmpf oeq, %71, %119 : vector<8x1024xf32>
    %c1024_i32 = arith.constant 1024 : i32
    %121 = vector.broadcast %c1024_i32 : i32 to vector<8x1024xi32>
    %122 = arith.select %120, %64, %121 : vector<8x1024xi1>, vector<8x1024xi32>
    %cst_49 = arith.constant dense<2147483647> : vector<8xi32>
    %123 = vector.multi_reduction <minsi>, %122, %cst_49 [1] : vector<8x1024xi32> to vector<8xi32>
    %124 = vector.shape_cast %123 : vector<8xi32> to vector<8x1xi32>
    %c0_i32_50 = arith.constant 0 : i32
    %125 = vector.broadcast %c0_i32_50 : i32 to vector<8x128xi32>
    %126 = arith.cmpi eq, %114, %125 : vector<8x128xi32>
    %127 = vector.shape_cast %118 : vector<8x1xf32> to vector<8x1xf32>
    %128 = vector.broadcast %127 : vector<8x1xf32> to vector<8x128xf32>
    %129 = arith.select %126, %128, %115 : vector<8x128xi1>, vector<8x128xf32>
    %c0_i32_51 = arith.constant 0 : i32
    %130 = vector.broadcast %c0_i32_51 : i32 to vector<8x128xi32>
    %131 = arith.cmpi eq, %114, %130 : vector<8x128xi32>
    %132 = vector.shape_cast %124 : vector<8x1xi32> to vector<8x1xi32>
    %133 = vector.broadcast %132 : vector<8x1xi32> to vector<8x128xi32>
    %134 = arith.select %131, %133, %116 : vector<8x128xi1>, vector<8x128xi32>
    %135 = vector.broadcast %124 : vector<8x1xi32> to vector<8x1024xi32>
    %136 = arith.cmpi eq, %64, %135 : vector<8x1024xi32>
    %cst_52 = arith.constant -2.000000e+00 : f32
    %137 = vector.broadcast %cst_52 : f32 to vector<8x1024xf32>
    %138 = arith.select %136, %137, %71 : vector<8x1024xi1>, vector<8x1024xf32>
    %cst_53 = arith.constant dense<0xFF800000> : vector<8xf32>
    %139 = vector.multi_reduction <maximumf>, %138, %cst_53 [1] : vector<8x1024xf32> to vector<8xf32>
    %140 = vector.shape_cast %139 : vector<8xf32> to vector<8x1xf32>
    %141 = vector.broadcast %140 : vector<8x1xf32> to vector<8x1024xf32>
    %142 = arith.cmpf oeq, %138, %141 : vector<8x1024xf32>
    %c1024_i32_54 = arith.constant 1024 : i32
    %143 = vector.broadcast %c1024_i32_54 : i32 to vector<8x1024xi32>
    %144 = arith.select %142, %64, %143 : vector<8x1024xi1>, vector<8x1024xi32>
    %cst_55 = arith.constant dense<2147483647> : vector<8xi32>
    %145 = vector.multi_reduction <minsi>, %144, %cst_55 [1] : vector<8x1024xi32> to vector<8xi32>
    %146 = vector.shape_cast %145 : vector<8xi32> to vector<8x1xi32>
    %c1_i32_56 = arith.constant 1 : i32
    %147 = vector.broadcast %c1_i32_56 : i32 to vector<8x128xi32>
    %148 = arith.cmpi eq, %114, %147 : vector<8x128xi32>
    %149 = vector.shape_cast %140 : vector<8x1xf32> to vector<8x1xf32>
    %150 = vector.broadcast %149 : vector<8x1xf32> to vector<8x128xf32>
    %151 = arith.select %148, %150, %129 : vector<8x128xi1>, vector<8x128xf32>
    %c1_i32_57 = arith.constant 1 : i32
    %152 = vector.broadcast %c1_i32_57 : i32 to vector<8x128xi32>
    %153 = arith.cmpi eq, %114, %152 : vector<8x128xi32>
    %154 = vector.shape_cast %146 : vector<8x1xi32> to vector<8x1xi32>
    %155 = vector.broadcast %154 : vector<8x1xi32> to vector<8x128xi32>
    %156 = arith.select %153, %155, %134 : vector<8x128xi1>, vector<8x128xi32>
    %157 = vector.broadcast %146 : vector<8x1xi32> to vector<8x1024xi32>
    %158 = arith.cmpi eq, %64, %157 : vector<8x1024xi32>
    %cst_58 = arith.constant -2.000000e+00 : f32
    %159 = vector.broadcast %cst_58 : f32 to vector<8x1024xf32>
    %160 = arith.select %158, %159, %138 : vector<8x1024xi1>, vector<8x1024xf32>
    %cst_59 = arith.constant dense<0xFF800000> : vector<8xf32>
    %161 = vector.multi_reduction <maximumf>, %160, %cst_59 [1] : vector<8x1024xf32> to vector<8xf32>
    %162 = vector.shape_cast %161 : vector<8xf32> to vector<8x1xf32>
    %163 = vector.broadcast %162 : vector<8x1xf32> to vector<8x1024xf32>
    %164 = arith.cmpf oeq, %160, %163 : vector<8x1024xf32>
    %c1024_i32_60 = arith.constant 1024 : i32
    %165 = vector.broadcast %c1024_i32_60 : i32 to vector<8x1024xi32>
    %166 = arith.select %164, %64, %165 : vector<8x1024xi1>, vector<8x1024xi32>
    %cst_61 = arith.constant dense<2147483647> : vector<8xi32>
    %167 = vector.multi_reduction <minsi>, %166, %cst_61 [1] : vector<8x1024xi32> to vector<8xi32>
    %168 = vector.shape_cast %167 : vector<8xi32> to vector<8x1xi32>
    %c2_i32 = arith.constant 2 : i32
    %169 = vector.broadcast %c2_i32 : i32 to vector<8x128xi32>
    %170 = arith.cmpi eq, %114, %169 : vector<8x128xi32>
    %171 = vector.shape_cast %162 : vector<8x1xf32> to vector<8x1xf32>
    %172 = vector.broadcast %171 : vector<8x1xf32> to vector<8x128xf32>
    %173 = arith.select %170, %172, %151 : vector<8x128xi1>, vector<8x128xf32>
    %c2_i32_62 = arith.constant 2 : i32
    %174 = vector.broadcast %c2_i32_62 : i32 to vector<8x128xi32>
    %175 = arith.cmpi eq, %114, %174 : vector<8x128xi32>
    %176 = vector.shape_cast %168 : vector<8x1xi32> to vector<8x1xi32>
    %177 = vector.broadcast %176 : vector<8x1xi32> to vector<8x128xi32>
    %178 = arith.select %175, %177, %156 : vector<8x128xi1>, vector<8x128xi32>
    %179 = vector.broadcast %168 : vector<8x1xi32> to vector<8x1024xi32>
    %180 = arith.cmpi eq, %64, %179 : vector<8x1024xi32>
    %cst_63 = arith.constant -2.000000e+00 : f32
    %181 = vector.broadcast %cst_63 : f32 to vector<8x1024xf32>
    %182 = arith.select %180, %181, %160 : vector<8x1024xi1>, vector<8x1024xf32>
    %cst_64 = arith.constant dense<0xFF800000> : vector<8xf32>
    %183 = vector.multi_reduction <maximumf>, %182, %cst_64 [1] : vector<8x1024xf32> to vector<8xf32>
    %184 = vector.shape_cast %183 : vector<8xf32> to vector<8x1xf32>
    %185 = vector.broadcast %184 : vector<8x1xf32> to vector<8x1024xf32>
    %186 = arith.cmpf oeq, %182, %185 : vector<8x1024xf32>
    %c1024_i32_65 = arith.constant 1024 : i32
    %187 = vector.broadcast %c1024_i32_65 : i32 to vector<8x1024xi32>
    %188 = arith.select %186, %64, %187 : vector<8x1024xi1>, vector<8x1024xi32>
    %cst_66 = arith.constant dense<2147483647> : vector<8xi32>
    %189 = vector.multi_reduction <minsi>, %188, %cst_66 [1] : vector<8x1024xi32> to vector<8xi32>
    %190 = vector.shape_cast %189 : vector<8xi32> to vector<8x1xi32>
    %c3_i32 = arith.constant 3 : i32
    %191 = vector.broadcast %c3_i32 : i32 to vector<8x128xi32>
    %192 = arith.cmpi eq, %114, %191 : vector<8x128xi32>
    %193 = vector.shape_cast %184 : vector<8x1xf32> to vector<8x1xf32>
    %194 = vector.broadcast %193 : vector<8x1xf32> to vector<8x128xf32>
    %195 = arith.select %192, %194, %173 : vector<8x128xi1>, vector<8x128xf32>
    %c3_i32_67 = arith.constant 3 : i32
    %196 = vector.broadcast %c3_i32_67 : i32 to vector<8x128xi32>
    %197 = arith.cmpi eq, %114, %196 : vector<8x128xi32>
    %198 = vector.shape_cast %190 : vector<8x1xi32> to vector<8x1xi32>
    %199 = vector.broadcast %198 : vector<8x1xi32> to vector<8x128xi32>
    %200 = arith.select %197, %199, %178 : vector<8x128xi1>, vector<8x128xi32>
    %c0_68 = arith.constant 0 : index
    %c0_69 = arith.constant 0 : index
    %c0_70 = arith.constant 0 : index
    %201 = vector.load %arg7[%c0_68, %c0_69, %c0_70] : memref<1x8x128xf32, #tpu.memory_space<vmem>>, vector<1x8x128xf32>
    %202 = vector.shape_cast %201 : vector<1x8x128xf32> to vector<8x128xf32>
    %203 = vector.shape_cast %195 : vector<8x128xf32> to vector<1x8x128xf32>
    tpu.vector_store %arg7[%c0_68, %c0_69, %c0_70], %203 {strides = array<i32>} : memref<1x8x128xf32, #tpu.memory_space<vmem>>, vector<1x8x128xf32>,
    %c0_71 = arith.constant 0 : index
    %c0_72 = arith.constant 0 : index
    %c0_73 = arith.constant 0 : index
    %204 = vector.load %arg8[%c0_71, %c0_72, %c0_73] : memref<1x8x128xi32, #tpu.memory_space<vmem>>, vector<1x8x128xi32>
    %205 = vector.shape_cast %204 : vector<1x8x128xi32> to vector<8x128xi32>
    %206 = vector.shape_cast %200 : vector<8x128xi32> to vector<1x8x128xi32>
    tpu.vector_store %arg8[%c0_71, %c0_72, %c0_73], %206 {strides = array<i32>} : memref<1x8x128xi32, #tpu.memory_space<vmem>>, vector<1x8x128xi32>,
    return
  }
  func.func @transform_0(%arg0: i32, %arg1: memref<2xi32, #tpu.memory_space<smem>>) -> (i32, i32, i32) {
    %c0_i32 = arith.constant 0 : i32
    %c0_i32_0 = arith.constant 0 : i32
    %c0_i32_1 = arith.constant 0 : i32
    return %arg0, %c0_i32, %c0_i32_0 : i32, i32, i32
  }
  func.func @transform_1(%arg0: i32, %arg1: memref<2xi32, #tpu.memory_space<smem>>) -> (i32, i32, i32) {
    %c0_i32 = arith.constant 0 : i32
    %c0_i32_0 = arith.constant 0 : i32
    %c0_i32_1 = arith.constant 0 : i32
    return %arg0, %c0_i32, %c0_i32_0 : i32, i32, i32
  }
  func.func @transform_2(%arg0: i32, %arg1: memref<2xi32, #tpu.memory_space<smem>>) -> (i32, i32, i32) {
    %c0_i32 = arith.constant 0 : i32
    %c0_i32_0 = arith.constant 0 : i32
    %c0_i32_1 = arith.constant 0 : i32
    return %arg0, %c0_i32, %c0_i32_0 : i32, i32, i32
  }
  func.func @transform_3(%arg0: i32, %arg1: memref<2xi32, #tpu.memory_space<smem>>) -> (i32, i32, i32) {
    %c0_i32 = arith.constant 0 : i32
    %c0_i32_0 = arith.constant 0 : i32
    %c0_i32_1 = arith.constant 0 : i32
    return %arg0, %c0_i32, %c0_i32_0 : i32, i32, i32
  }
  func.func @transform_4(%arg0: i32, %arg1: memref<2xi32, #tpu.memory_space<smem>>) -> (i32, i32, i32) {
    %c0_i32 = arith.constant 0 : i32
    %c0_i32_0 = arith.constant 0 : i32
    %c0_i32_1 = arith.constant 0 : i32
    return %arg0, %c0_i32, %c0_i32_0 : i32, i32, i32
  }
  func.func @transform_5(%arg0: i32, %arg1: memref<2xi32, #tpu.memory_space<smem>>) -> (i32, i32, i32) {
    %c0_i32 = arith.constant 0 : i32
    %c0_i32_0 = arith.constant 0 : i32
    %c0_i32_1 = arith.constant 0 : i32
    return %arg0, %c0_i32, %c0_i32_0 : i32, i32, i32
  }
  func.func @transform_6(%arg0: i32, %arg1: memref<2xi32, #tpu.memory_space<smem>>) -> (i32, i32, i32) {
    %c0_i32 = arith.constant 0 : i32
    %c0_i32_0 = arith.constant 0 : i32
    %c0_i32_1 = arith.constant 0 : i32
    return %arg0, %c0_i32, %c0_i32_0 : i32, i32, i32
  }
}

</mosaic_0001>

<llo_original>
// kernel: stage1_match_batched.1
$region0: #{stage1_match_batched.1}
  #allocation0 [shape = 'u32[]', space=smem, size = 0x4, offset = 0x4, fixed_abs, tag = 'smem constant byte address 0x4 - core index']
  #allocation1 [shape = 'u32[72,128]{1,0:T(1,128)}', space=vmem, size = 0x9000, scoped, tag = 'internal scratch']
  #allocation2 [shape = 's32[1]{0}', space=sflag, size = 0x4, scoped, tag = 'scoped memory for stage1_match_batched.1']
  #allocation3 [shape = 'u8[512]{0}', space=smem, size = 0x200, scoped, tag = 'prefetched SMEM operand 0']
  %s0 = inlined_call_operand.vmem [shape: s32[2], index: 0, kind: input, shape index: {}]
  %s1 = inlined_call_operand.vmem [shape: f32[2,8,4], index: 1, kind: input, shape index: {}]
  %s2 = inlined_call_operand.hbm [shape: f32[2,4,1024], index: 2, kind: input, shape index: {}]
  %s3 = inlined_call_operand.hbm [shape: s32[2,1,1024], index: 3, kind: output, shape index: {0}]
  %s4 = inlined_call_operand.hbm [shape: s32[2,1,1024], index: 4, kind: output, shape index: {1}]
  %s5 = inlined_call_operand.hbm [shape: f32[2,1,1024], index: 5, kind: output, shape index: {2}]
  %s6 = inlined_call_operand.hbm [shape: f32[2,8,128], index: 6, kind: output, shape index: {3}]
  %s7 = inlined_call_operand.hbm [shape: s32[2,8,128], index: 7, kind: output, shape index: {4}]
  %8 = xla_tuple %s3, %s4, %s5, %s6, %s7
  %s9 = sld [smem:[#allocation0]]
  $region77: #{stage1_match_batched.1} parent=0
    _
  %s11 = ssub.s32 1, %s9
  %s12 = scalar_select 0, %s11, %s9
  %s14 = sshll.u32 %s0, 4
  %s15 = int_to_ptr.vmem [resolvable:$true] %s14
  %17 = dma.vmem_to_smem %s15, 16, [#allocation3], [#allocation2]
  %19 = dma.done [#allocation2], 16
  %20 = sfence
  $region1: #{stage1_match_batched.1} parent=0
    #allocation4 [shape = 'u8[32768]{0}', space=vmem, size = 0x8000, scoped, tag = 'input window, operand 2']
    #allocation5 [shape = 's32[2]{0}', space=sflag, size = 0x8, scoped, tag = 'scoped memory for stage1_match_batched.1']
    #allocation6 [shape = 's32[2]{0}', space=sflag, size = 0x8, scoped, tag = 'scoped memory for stage1_match_batched.1']
    #allocation7 [shape = 'u8[8192]{0}', space=vmem, size = 0x2000, scoped, tag = 'output window, operand 0']
    #allocation8 [shape = 'u8[8192]{0}', space=vmem, size = 0x2000, scoped, tag = 'output window, operand 1']
    #allocation9 [shape = 's32[2]{0}', space=sflag, size = 0x8, scoped, tag = 'scoped memory for stage1_match_batched.1']
    #allocation10 [shape = 'u8[8192]{0}', space=vmem, size = 0x2000, scoped, tag = 'output window, operand 2']
    #allocation11 [shape = 'u8[8192]{0}', space=vmem, size = 0x2000, scoped, tag = 'output window, operand 3']
    #allocation12 [shape = 's32[2]{0}', space=sflag, size = 0x8, scoped, tag = 'scoped memory for stage1_match_batched.1']
    #allocation13 [shape = 'u8[8192]{0}', space=vmem, size = 0x2000, scoped, tag = 'output window, operand 4']
    %21 = vsyncpa [#allocation5], 0
    %s22 = scalar_lea.sflag [#allocation5], 1
    %23 = vsyncpa %s22, 0
    %24 = vsyncpa [#allocation6], 0
    %s25 = scalar_lea.sflag [#allocation6], 1
    %26 = vsyncpa %s25, 0
    %27 = vsyncpa [#allocation9], 0
    %s28 = scalar_lea.sflag [#allocation9], 1
    %29 = vsyncpa %s28, 0
    %30 = vsyncpa [#allocation12], 0
    %s31 = scalar_lea.sflag [#allocation12], 1
    %32 = vsyncpa %s31, 0
    loop: start=0, step=1, limit=4
    $region2: #{stage1_match_batched.1} parent=1 // loop_pre_header
      _
    $region3: #{stage1_match_batched.1} parent=1 // loop_header
      %s34 = sphi 0, %s38
      %p35 = scmp.ge.s32.totalorder %s34, 4
      %s44 = sphi 0, %s46
      %s47 = sphi 0, %s44
      %s48 = sphi 0, %s47
      %s64 = sphi 0, %s48
      %s70 = sphi 0, %s72
      %s73 = sphi 0, %s70
      %s74 = sphi 0, %s73
      %s90 = sphi 0, %s74
      %s96 = sphi 0, %s98
      %s99 = sphi 0, %s96
      %s100 = sphi 0, %s99
      %s116 = sphi 0, %s100
      %s122 = sphi 0, %s124
      %s125 = sphi 0, %s122
      %s126 = sphi 0, %s125
      %s142 = sphi 0, %s126
      %s148 = sphi 0, %s150
      %s151 = sphi 0, %s148
      %s152 = sphi 0, %s151
      %s168 = sphi 0, %s152
      %s174 = sphi 0, %s176
      %s177 = sphi 0, %s174
      %s178 = sphi 0, %s177
      %s194 = sphi 0, %s178
      %s200 = sphi 0, %s202
      %s203 = sphi 0, %s200
      %s204 = sphi 0, %s203
      %s220 = sphi 0, %s204
    $region4: #{stage1_match_batched.1} parent=1 // loop_header_branch
      %37 = sbr.rel (%p35) target = $region8
    $region5: #{stage1_match_batched.1} parent=1 // loop_body
      %s39 = ssub.s32 %s34, 1
      %s40 = ssub.s32 %s34, 2
      %s41 = sadd.s32 %s34, 1
      %s42 = ssub.s32 %s34, %s41
      %p43 = scmp.eq.s32.totalorder %s42, 0
      %s45 = sadd.s32 %s44, 1
      %s46 = scalar_select %p43, %s44, %s45
      %p49 = pneg %p43
      %p50 = scmp.eq.s32.totalorder %s34, 1
      %p51 = por %p49, %p50
      %p52 = scmp.ne.s32.totalorder %s44, %s47
      %p53 = scmp.eq.s32.totalorder %s34, 0
      %p54 = por %p52, %p53
      %p55 = scmp.ne.s32.totalorder %s44, %s47
      %p56 = scmp.eq.s32.totalorder %s39, 1
      %p57 = por %p55, %p56
      %p58 = scmp.ne.s32.totalorder %s47, %s48
      %p59 = scmp.eq.s32.totalorder %s39, 0
      %p60 = por %p58, %p59
      %p61 = scmp.ne.s32.totalorder %s47, %s48
      %p62 = scmp.eq.s32.totalorder %s40, 1
      %p63 = por %p61, %p62
      %p65 = scmp.ne.s32.totalorder %s48, %s64
      %p66 = scmp.eq.s32.totalorder %s40, 0
      %p67 = por %p65, %p66
      %s68 = ssub.s32 %s34, %s41
      %p69 = scmp.eq.s32.totalorder %s68, 0
      %s71 = sadd.s32 %s70, 1
      %s72 = scalar_select %p69, %s70, %s71
      %p75 = pneg %p69
      %p76 = scmp.eq.s32.totalorder %s34, 1
      %p77 = por %p75, %p76
      %p78 = scmp.ne.s32.totalorder %s70, %s73
      %p79 = scmp.eq.s32.totalorder %s34, 0
      %p80 = por %p78, %p79
      %p81 = scmp.ne.s32.totalorder %s70, %s73
      %p82 = scmp.eq.s32.totalorder %s39, 1
      %p83 = por %p81, %p82
      %p84 = scmp.ne.s32.totalorder %s73, %s74
      %p85 = scmp.eq.s32.totalorder %s39, 0
      %p86 = por %p84, %p85
      %p87 = scmp.ne.s32.totalorder %s73, %s74
      %p88 = scmp.eq.s32.totalorder %s40, 1
      %p89 = por %p87, %p88
      %p91 = scmp.ne.s32.totalorder %s74, %s90
      %p92 = scmp.eq.s32.totalorder %s40, 0
      %p93 = por %p91, %p92
      %s94 = ssub.s32 %s34, %s41
      %p95 = scmp.eq.s32.totalorder %s94, 0
      %s97 = sadd.s32 %s96, 1
      %s98 = scalar_select %p95, %s96, %s97
      %p101 = pneg %p95
      %p102 = scmp.eq.s32.totalorder %s34, 1
      %p103 = por %p101, %p102
      %p104 = scmp.ne.s32.totalorder %s96, %s99
      %p105 = scmp.eq.s32.totalorder %s34, 0
      %p106 = por %p104, %p105
      %p107 = scmp.ne.s32.totalorder %s96, %s99
      %p108 = scmp.eq.s32.totalorder %s39, 1
      %p109 = por %p107, %p108
      %p110 = scmp.ne.s32.totalorder %s99, %s100
      %p111 = scmp.eq.s32.totalorder %s39, 0
      %p112 = por %p110, %p111
      %p113 = scmp.ne.s32.totalorder %s99, %s100
      %p114 = scmp.eq.s32.totalorder %s40, 1
      %p115 = por %p113, %p114
      %p117 = scmp.ne.s32.totalorder %s100, %s116
      %p118 = scmp.eq.s32.totalorder %s40, 0
      %p119 = por %p117, %p118
      %s120 = ssub.s32 %s34, %s41
      %p121 = scmp.eq.s32.totalorder %s120, 0
      %s123 = sadd.s32 %s122, 1
      %s124 = scalar_select %p121, %s122, %s123
      %p127 = pneg %p121
      %p128 = scmp.eq.s32.totalorder %s34, 1
      %p129 = por %p127, %p128
      %p130 = scmp.ne.s32.totalorder %s122, %s125
      %p131 = scmp.eq.s32.totalorder %s34, 0
      %p132 = por %p130, %p131
      %p133 = scmp.ne.s32.totalorder %s122, %s125
      %p134 = scmp.eq.s32.totalorder %s39, 1
      %p135 = por %p133, %p134
      %p136 = scmp.ne.s32.totalorder %s125, %s126
      %p137 = scmp.eq.s32.totalorder %s39, 0
      %p138 = por %p136, %p137
      %p139 = scmp.ne.s32.totalorder %s125, %s126
      %p140 = scmp.eq.s32.totalorder %s40, 1
      %p141 = por %p139, %p140
      %p143 = scmp.ne.s32.totalorder %s126, %s142
      %p144 = scmp.eq.s32.totalorder %s40, 0
      %p145 = por %p143, %p144
      %s146 = ssub.s32 %s34, %s41
      %p147 = scmp.eq.s32.totalorder %s146, 0
      %s149 = sadd.s32 %s148, 1
      %s150 = scalar_select %p147, %s148, %s149
      %p153 = pneg %p147
      %p154 = scmp.eq.s32.totalorder %s34, 1
      %p155 = por %p153, %p154
      %p156 = scmp.ne.s32.totalorder %s148, %s151
      %p157 = scmp.eq.s32.totalorder %s34, 0
      %p158 = por %p156, %p157
      %p159 = scmp.ne.s32.totalorder %s148, %s151
      %p160 = scmp.eq.s32.totalorder %s39, 1
      %p161 = por %p159, %p160
      %p162 = scmp.ne.s32.totalorder %s151, %s152
      %p163 = scmp.eq.s32.totalorder %s39, 0
      %p164 = por %p162, %p163
      %p165 = scmp.ne.s32.totalorder %s151, %s152
      %p166 = scmp.eq.s32.totalorder %s40, 1
      %p167 = por %p165, %p166
      %p169 = scmp.ne.s32.totalorder %s152, %s168
      %p170 = scmp.eq.s32.totalorder %s40, 0
      %p171 = por %p169, %p170
      %s172 = ssub.s32 %s34, %s41
      %p173 = scmp.eq.s32.totalorder %s172, 0
      %s175 = sadd.s32 %s174, 1
      %s176 = scalar_select %p173, %s174, %s175
      %p179 = pneg %p173
      %p180 = scmp.eq.s32.totalorder %s34, 1
      %p181 = por %p179, %p180
      %p182 = scmp.ne.s32.totalorder %s174, %s177
      %p183 = scmp.eq.s32.totalorder %s34, 0
      %p184 = por %p182, %p183
      %p185 = scmp.ne.s32.totalorder %s174, %s177
      %p186 = scmp.eq.s32.totalorder %s39, 1
      %p187 = por %p185, %p186
      %p188 = scmp.ne.s32.totalorder %s177, %s178
      %p189 = scmp.eq.s32.totalorder %s39, 0
      %p190 = por %p188, %p189
      %p191 = scmp.ne.s32.totalorder %s177, %s178
      %p192 = scmp.eq.s32.totalorder %s40, 1
      %p193 = por %p191, %p192
      %p195 = scmp.ne.s32.totalorder %s178, %s194
      %p196 = scmp.eq.s32.totalorder %s40, 0
      %p197 = por %p195, %p196
      %s198 = ssub.s32 %s34, %s41
      %p199 = scmp.eq.s32.totalorder %s198, 0
      %s201 = sadd.s32 %s200, 1
      %s202 = scalar_select %p199, %s200, %s201
      %p205 = pneg %p199
      %p206 = scmp.eq.s32.totalorder %s34, 1
      %p207 = por %p205, %p206
      %p208 = scmp.ne.s32.totalorder %s200, %s203
      %p209 = scmp.eq.s32.totalorder %s34, 0
      %p210 = por %p208, %p209
      %p211 = scmp.ne.s32.totalorder %s200, %s203
      %p212 = scmp.eq.s32.totalorder %s39, 1
      %p213 = por %p211, %p212
      %p214 = scmp.ne.s32.totalorder %s203, %s204
      %p215 = scmp.eq.s32.totalorder %s39, 0
      %p216 = por %p214, %p215
      %p217 = scmp.ne.s32.totalorder %s203, %s204
      %p218 = scmp.eq.s32.totalorder %s40, 1
      %p219 = por %p217, %p218
      %p221 = scmp.ne.s32.totalorder %s204, %s220
      %p222 = scmp.eq.s32.totalorder %s40, 0
      %p223 = por %p221, %p222
      %p224 = scmp.le.s32.totalorder 1, %s34
      %p225 = scmp.lt.s32.totalorder %s34, 3
      %p226 = pnand %p224, %p225
      %p227 = pneg %p226
      // Predicated region
      $region9: #{stage1_match_batched.1} parent=5 // pred_check
        _
      $region10: #{stage1_match_batched.1} parent=5 // pred_check_branch
        %229 = sbr.rel (%p226) target = $region12
      $region11: #{stage1_match_batched.1} parent=5 // pred_region
        %s230 = ssub.s32 %s34, 1
      $region12: #{stage1_match_batched.1} parent=5 // pred_fallthru
        _
      %p231 = scmp.lt.s32.totalorder %s34, 2
      // Predicated region
      $region13: #{stage1_match_batched.1} parent=5 // pred_check
        %p232 = pneg %p231
      $region14: #{stage1_match_batched.1} parent=5 // pred_check_branch
        %234 = sbr.rel (%p232) target = $region16
      $region15: #{stage1_match_batched.1} parent=5 // pred_region
        // Predicated region
        $region17: #{stage1_match_batched.1} parent=15 // pred_check
          %p235 = pneg %p54
        $region18: #{stage1_match_batched.1} parent=15 // pred_check_branch
          %237 = sbr.rel (%p235) target = $region20
        $region19: #{stage1_match_batched.1} parent=15 // pred_region
          %p238 = scmp.lt.s32.totalorder %s34, 1
          %s239 = scalar_select %p238, %s34, 1
          %s240 = smul.addr %s239, 8
          %s241 = scalar_lea.vmem %s1, %s240
        $region20: #{stage1_match_batched.1} parent=15 // pred_fallthru
          _
        // Predicated region
        $region21: #{stage1_match_batched.1} parent=15 // pred_check
          %p242 = pneg %p80
        $region22: #{stage1_match_batched.1} parent=15 // pred_check_branch
          %244 = sbr.rel (%p242) target = $region24
        $region23: #{stage1_match_batched.1} parent=15 // pred_region
          %s245 = sand.u32 %s70, 1
          %s246 = scalar_lea.sflag [#allocation5], %s245
          %s247 = sand.u32 %s70, 1
          %s248 = smul.addr %s247, 32
          %s249 = scalar_lea.vmem [#allocation4], %s248
          %251 = vsyncadd %s246, 0
          %s252 = smul.addr %s34, 8
          %s253 = smul.addr %s252, 4
          %s254 = scalar_lea.hbm %s2, %s253
          %s256 = sshll.u32 %s254, 4
          %s257 = int_to_ptr.hbm [resolvable:$true] %s256
          %s258 = sshll.u32 %s249, 4
          %s259 = int_to_ptr.vmem [resolvable:$true] %s258
          %261 = dma.hbm_to_vmem [thread:$0]  %s257, 512, %s259, %s246
        $region24: #{stage1_match_batched.1} parent=15 // pred_fallthru
          _
      $region16: #{stage1_match_batched.1} parent=5 // pred_fallthru
        _
      %p262 = scmp.le.s32.totalorder 1, %s34
      %p263 = scmp.lt.s32.totalorder %s34, 3
      %p264 = pnand %p262, %p263
      %p265 = pneg %p264
      // Predicated region
      $region25: #{stage1_match_batched.1} parent=5 // pred_check
        _
      $region26: #{stage1_match_batched.1} parent=5 // pred_check_branch
        %267 = sbr.rel (%p264) target = $region28
      $region27: #{stage1_match_batched.1} parent=5 // pred_region
        %s268 = ssub.s32 %s34, 1
        %s269 = sand.u32 %s73, 1
        %s270 = scalar_lea.sflag [#allocation5], %s269
        %s271 = sand.u32 %s73, 1
        %s272 = smul.addr %s271, 32
        %s273 = scalar_lea.vmem [#allocation4], %s272
        // Predicated region
        $region29: #{stage1_match_batched.1} parent=27 // pred_check
          %p274 = pneg %p86
        $region30: #{stage1_match_batched.1} parent=27 // pred_check_branch
          %276 = sbr.rel (%p274) target = $region32
        $region31: #{stage1_match_batched.1} parent=27 // pred_region
          %278 = dma.done %s270, 512
        $region32: #{stage1_match_batched.1} parent=27 // pred_fallthru
          _
        %p279 = scmp.lt.s32.totalorder %s39, 1
        %s280 = scalar_select %p279, %s39, 1
        %s281 = smul.addr %s280, 8
        %s282 = scalar_lea.vmem %s1, %s281
        %p283 = pneg %p60
        %p284 = pneg %p57
        %s285 = sand.u32 %s73, 1
        %s286 = scalar_lea.sflag [#allocation5], %s285
        %s287 = sand.u32 %s73, 1
        %s288 = smul.addr %s287, 32
        %s289 = scalar_lea.vmem [#allocation4], %s288
        %p290 = pneg %p86
        %p291 = pneg %p83
        %p292 = pneg %p112
        %p293 = pneg %p109
        %s294 = sand.u32 %s99, 1
        %s295 = scalar_lea.sflag [#allocation6], %s294
        %s296 = sand.u32 %s99, 1
        %s297 = smul.addr %s296, 8
        %s298 = scalar_lea.vmem [#allocation7], %s297
        %p299 = pneg %p138
        %p300 = pneg %p135
        %s301 = sand.u32 %s39, 1
        %s302 = scalar_lea.sflag [#allocation9], %s301
        %s303 = sand.u32 %s125, 1
        %s304 = smul.addr %s303, 8
        %s305 = scalar_lea.vmem [#allocation8], %s304
        %p306 = pneg %p164
        %p307 = pneg %p161
        %s308 = sand.u32 %s39, 1
        %s309 = scalar_lea.sflag [#allocation9], %s308
        %s310 = sand.u32 %s151, 1
        %s311 = smul.addr %s310, 8
        %s312 = scalar_lea.vmem [#allocation10], %s311
        %p313 = pneg %p190
        %p314 = pneg %p187
        %s315 = sand.u32 %s39, 1
        %s316 = scalar_lea.sflag [#allocation12], %s315
        %s317 = sand.u32 %s177, 1
        %s318 = smul.addr %s317, 8
        %s319 = scalar_lea.vmem [#allocation11], %s318
        %p320 = pneg %p216
        %p321 = pneg %p213
        %s322 = sand.u32 %s39, 1
        %s323 = scalar_lea.sflag [#allocation12], %s322
        %s324 = sand.u32 %s203, 1
        %s325 = smul.addr %s324, 8
        %s326 = scalar_lea.vmem [#allocation13], %s325
        %p327 = scmp.lt.s32.totalorder %s39, 1
        %s328 = scalar_select %p327, %s39, 1
        %s329 = smul.addr %s328, 8
        %s330 = scalar_lea.vmem %s1, %s329
        %s331 = sld [smem:[#allocation3 + %s39]]
        %v332 = vld [vmem:[%s330] sm:$0xff]
        %334 = vrot.lane.b32.xlu0 %v332, 2
        %v335 = vpop.permute.xlu0 %334
        %v337 = vsub.f32 %v332, %v335
        %339 = vrot.lane.b32.xlu0 %v337, 127
        %v340 = vpop.permute.xlu0 %339
        %v342 = vmul.f32 %v337, %v340
        %v343 = vld [vmem:[%s273] ss:$4 sm:$0xff]
        %s344 = scalar_lea.vmem %s273, 1 [#allocation4]
        %v345 = vld [vmem:[%s344] ss:$4 sm:$0xff]
        %s346 = scalar_lea.vmem %s273, 2 [#allocation4]
        %v347 = vld [vmem:[%s346] ss:$4 sm:$0xff]
        %s348 = scalar_lea.vmem %s273, 3 [#allocation4]
        %v349 = vld [vmem:[%s348] ss:$4 sm:$0xff]
        %v350 = vmul.f32 %v347, 0.5
        %v351 = vsub.f32 %v343, %v350
        %v352 = vmul.f32 %v349, 0.5
        %v353 = vsub.f32 %v345, %v352
        %v354 = vadd.f32 %v343, %v350
        %v355 = vadd.f32 %v345, %v352
        %v356 = vsub.f32 %v354, %v351
        %v357 = vsub.f32 %v355, %v353
        %v358 = vmul.f32 %v356, %v357
        %359 = vset.pattern.permute.xlu0 2
        %360 = vperm.xlu0 %359, %v332
        %v361 = vpop.permute.xlu0 %360
        %v364 = vperm.slane %v354, 0
        %v365 = vperm.slane %v354, 1
        %v366 = vperm.slane %v354, 2
        %v367 = vperm.slane %v354, 3
        %v368 = vperm.slane %v354, 4
        %v369 = vperm.slane %v354, 5
        %v370 = vperm.slane %v354, 6
        %v371 = vperm.slane %v354, 7
        %v380 = vmin.f32 %v361, %v364
        %v381 = vmin.f32 %v361, %v365
        %v382 = vmin.f32 %v361, %v366
        %v383 = vmin.f32 %v361, %v367
        %v384 = vmin.f32 %v361, %v368
        %v385 = vmin.f32 %v361, %v369
        %v386 = vmin.f32 %v361, %v370
        %v387 = vmin.f32 %v361, %v371
        %388 = vset.pattern.permute.xlu0 0
        %389 = vperm.xlu0 %388, %v332
        %v390 = vpop.permute.xlu0 %389
        %v393 = vperm.slane %v351, 0
        %v394 = vperm.slane %v351, 1
        %v395 = vperm.slane %v351, 2
        %v396 = vperm.slane %v351, 3
        %v397 = vperm.slane %v351, 4
        %v398 = vperm.slane %v351, 5
        %v399 = vperm.slane %v351, 6
        %v400 = vperm.slane %v351, 7
        %v409 = vmax.f32 %v390, %v393
        %v410 = vmax.f32 %v390, %v394
        %v411 = vmax.f32 %v390, %v395
        %v412 = vmax.f32 %v390, %v396
        %v413 = vmax.f32 %v390, %v397
        %v414 = vmax.f32 %v390, %v398
        %v415 = vmax.f32 %v390, %v399
        %v416 = vmax.f32 %v390, %v400
        %v417 = vsub.f32 %v380, %v409
        %v418 = vsub.f32 %v381, %v410
        %v419 = vsub.f32 %v382, %v411
        %v420 = vsub.f32 %v383, %v412
        %v421 = vsub.f32 %v384, %v413
        %v422 = vsub.f32 %v385, %v414
        %v423 = vsub.f32 %v386, %v415
        %v424 = vsub.f32 %v387, %v416
        %v425 = vmax.f32 %v417, 0.0
        %v426 = vmax.f32 %v418, 0.0
        %v427 = vmax.f32 %v419, 0.0
        %v428 = vmax.f32 %v420, 0.0
        %v429 = vmax.f32 %v421, 0.0
        %v430 = vmax.f32 %v422, 0.0
        %v431 = vmax.f32 %v423, 0.0
        %v432 = vmax.f32 %v424, 0.0
        %433 = vset.pattern.permute.xlu0 3
        %434 = vperm.xlu0 %433, %v332
        %v435 = vpop.permute.xlu0 %434
        %v438 = vperm.slane %v355, 0
        %v439 = vperm.slane %v355, 1
        %v440 = vperm.slane %v355, 2
        %v441 = vperm.slane %v355, 3
        %v442 = vperm.slane %v355, 4
        %v443 = vperm.slane %v355, 5
        %v444 = vperm.slane %v355, 6
        %v445 = vperm.slane %v355, 7
        %v454 = vmin.f32 %v435, %v438
        %v455 = vmin.f32 %v435, %v439
        %v456 = vmin.f32 %v435, %v440
        %v457 = vmin.f32 %v435, %v441
        %v458 = vmin.f32 %v435, %v442
        %v459 = vmin.f32 %v435, %v443
        %v460 = vmin.f32 %v435, %v444
        %v461 = vmin.f32 %v435, %v445
        %462 = vset.pattern.permute.xlu0 1
        %463 = vperm.xlu0 %462, %v332
        %v464 = vpop.permute.xlu0 %463
        %v467 = vperm.slane %v353, 0
        %v468 = vperm.slane %v353, 1
        %v469 = vperm.slane %v353, 2
        %v470 = vperm.slane %v353, 3
        %v471 = vperm.slane %v353, 4
        %v472 = vperm.slane %v353, 5
        %v473 = vperm.slane %v353, 6
        %v474 = vperm.slane %v353, 7
        %v483 = vmax.f32 %v464, %v467
        %v484 = vmax.f32 %v464, %v468
        %v485 = vmax.f32 %v464, %v469
        %v486 = vmax.f32 %v464, %v470
        %v487 = vmax.f32 %v464, %v471
        %v488 = vmax.f32 %v464, %v472
        %v489 = vmax.f32 %v464, %v473
        %v490 = vmax.f32 %v464, %v474
        %v491 = vsub.f32 %v454, %v483
        %v492 = vsub.f32 %v455, %v484
        %v493 = vsub.f32 %v456, %v485
        %v494 = vsub.f32 %v457, %v486
        %v495 = vsub.f32 %v458, %v487
        %v496 = vsub.f32 %v459, %v488
        %v497 = vsub.f32 %v460, %v489
        %v498 = vsub.f32 %v461, %v490
        %v499 = vmax.f32 %v491, 0.0
        %v500 = vmax.f32 %v492, 0.0
        %v501 = vmax.f32 %v493, 0.0
        %v502 = vmax.f32 %v494, 0.0
        %v503 = vmax.f32 %v495, 0.0
        %v504 = vmax.f32 %v496, 0.0
        %v505 = vmax.f32 %v497, 0.0
        %v506 = vmax.f32 %v498, 0.0
        %v507 = vmul.f32 %v425, %v499
        %v508 = vmul.f32 %v426, %v500
        %v509 = vmul.f32 %v427, %v501
        %v510 = vmul.f32 %v428, %v502
        %v511 = vmul.f32 %v429, %v503
        %v512 = vmul.f32 %v430, %v504
        %v513 = vmul.f32 %v431, %v505
        %v514 = vmul.f32 %v432, %v506
        %516 = vset.pattern.permute.xlu0 2
        %517 = vperm.xlu0 %516, %v342
        %v518 = vpop.permute.xlu0 %517
        %v521 = vperm.slane %v358, 0
        %v522 = vperm.slane %v358, 1
        %v523 = vperm.slane %v358, 2
        %v524 = vperm.slane %v358, 3
        %v525 = vperm.slane %v358, 4
        %v526 = vperm.slane %v358, 5
        %v527 = vperm.slane %v358, 6
        %v528 = vperm.slane %v358, 7
        %v537 = vadd.f32 %v518, %v521
        %v538 = vadd.f32 %v518, %v522
        %v539 = vadd.f32 %v518, %v523
        %v540 = vadd.f32 %v518, %v524
        %v541 = vadd.f32 %v518, %v525
        %v542 = vadd.f32 %v518, %v526
        %v543 = vadd.f32 %v518, %v527
        %v544 = vadd.f32 %v518, %v528
        %v545 = vsub.f32 %v537, %v507
        %v546 = vsub.f32 %v538, %v508
        %v547 = vsub.f32 %v539, %v509
        %v548 = vsub.f32 %v540, %v510
        %v549 = vsub.f32 %v541, %v511
        %v550 = vsub.f32 %v542, %v512
        %v551 = vsub.f32 %v543, %v513
        %v552 = vsub.f32 %v544, %v514
        %v553 = vmax.f32 %v545, 1e-09
        %v554 = vmax.f32 %v546, 1e-09
        %v555 = vmax.f32 %v547, 1e-09
        %v556 = vmax.f32 %v548, 1e-09
        %v557 = vmax.f32 %v549, 1e-09
        %v558 = vmax.f32 %v550, 1e-09
        %v559 = vmax.f32 %v551, 1e-09
        %v560 = vmax.f32 %v552, 1e-09
        %v561 = vrcp.pop %v553
        %v562 = vmul.f32 %v553, %v561
        %v563 = vsub.f32 1.0, %v562
        %v564 = vmul.f32 %v561, %v563
        %v565 = vadd.f32 %v561, %v564
        %vm566 = vweird.f32 %v553
        %vm567 = vweird.f32 %v561
        %vm568 = vmor %vm566, %vm567
        %v569 = vsel %vm568, %v561, %v565
        %v570 = vand.u32 2147483647, %v553
        %vm571 = vcmp.eq.f32.partialorder %v570, 8.507059e+37
        %v572 = vand.u32 %v553, 2147483648
        %v573 = vor.u32 1.1754944e-38, %v572
        %v574 = vsel %vm571, %v573, %v569
        %v575 = vrcp.pop %v554
        %v576 = vmul.f32 %v554, %v575
        %v577 = vsub.f32 1.0, %v576
        %v578 = vmul.f32 %v575, %v577
        %v579 = vadd.f32 %v575, %v578
        %vm580 = vweird.f32 %v554
        %vm581 = vweird.f32 %v575
        %vm582 = vmor %vm580, %vm581
        %v583 = vsel %vm582, %v575, %v579
        %v584 = vand.u32 2147483647, %v554
        %vm585 = vcmp.eq.f32.partialorder %v584, 8.507059e+37
        %v586 = vand.u32 %v554, 2147483648
        %v587 = vor.u32 1.1754944e-38, %v586
        %v588 = vsel %vm585, %v587, %v583
        %v589 = vrcp.pop %v555
        %v590 = vmul.f32 %v555, %v589
        %v591 = vsub.f32 1.0, %v590
        %v592 = vmul.f32 %v589, %v591
        %v593 = vadd.f32 %v589, %v592
        %vm594 = vweird.f32 %v555
        %vm595 = vweird.f32 %v589
        %vm596 = vmor %vm594, %vm595
        %v597 = vsel %vm596, %v589, %v593
        %v598 = vand.u32 2147483647, %v555
        %vm599 = vcmp.eq.f32.partialorder %v598, 8.507059e+37
        %v600 = vand.u32 %v555, 2147483648
        %v601 = vor.u32 1.1754944e-38, %v600
        %v602 = vsel %vm599, %v601, %v597
        %v603 = vrcp.pop %v556
        %v604 = vmul.f32 %v556, %v603
        %v605 = vsub.f32 1.0, %v604
        %v606 = vmul.f32 %v603, %v605
        %v607 = vadd.f32 %v603, %v606
        %vm608 = vweird.f32 %v556
        %vm609 = vweird.f32 %v603
        %vm610 = vmor %vm608, %vm609
        %v611 = vsel %vm610, %v603, %v607
        %v612 = vand.u32 2147483647, %v556
        %vm613 = vcmp.eq.f32.partialorder %v612, 8.507059e+37
        %v614 = vand.u32 %v556, 2147483648
        %v615 = vor.u32 1.1754944e-38, %v614
        %v616 = vsel %vm613, %v615, %v611
        %v617 = vrcp.pop %v557
        %v618 = vmul.f32 %v557, %v617
        %v619 = vsub.f32 1.0, %v618
        %v620 = vmul.f32 %v617, %v619
        %v621 = vadd.f32 %v617, %v620
        %vm622 = vweird.f32 %v557
        %vm623 = vweird.f32 %v617
        %vm624 = vmor %vm622, %vm623
        %v625 = vsel %vm624, %v617, %v621
        %v626 = vand.u32 2147483647, %v557
        %vm627 = vcmp.eq.f32.partialorder %v626, 8.507059e+37
        %v628 = vand.u32 %v557, 2147483648
        %v629 = vor.u32 1.1754944e-38, %v628
        %v630 = vsel %vm627, %v629, %v625
        %v631 = vrcp.pop %v558
        %v632 = vmul.f32 %v558, %v631
        %v633 = vsub.f32 1.0, %v632
        %v634 = vmul.f32 %v631, %v633
        %v635 = vadd.f32 %v631, %v634
        %vm636 = vweird.f32 %v558
        %vm637 = vweird.f32 %v631
        %vm638 = vmor %vm636, %vm637
        %v639 = vsel %vm638, %v631, %v635
        %v640 = vand.u32 2147483647, %v558
        %vm641 = vcmp.eq.f32.partialorder %v640, 8.507059e+37
        %v642 = vand.u32 %v558, 2147483648
        %v643 = vor.u32 1.1754944e-38, %v642
        %v644 = vsel %vm641, %v643, %v639
        %v645 = vrcp.pop %v559
        %v646 = vmul.f32 %v559, %v645
        %v647 = vsub.f32 1.0, %v646
        %v648 = vmul.f32 %v645, %v647
        %v649 = vadd.f32 %v645, %v648
        %vm650 = vweird.f32 %v559
        %vm651 = vweird.f32 %v645
        %vm652 = vmor %vm650, %vm651
        %v653 = vsel %vm652, %v645, %v649
        %v654 = vand.u32 2147483647, %v559
        %vm655 = vcmp.eq.f32.partialorder %v654, 8.507059e+37
        %v656 = vand.u32 %v559, 2147483648
        %v657 = vor.u32 1.1754944e-38, %v656
        %v658 = vsel %vm655, %v657, %v653
        %v659 = vrcp.pop %v560
        %v660 = vmul.f32 %v560, %v659
        %v661 = vsub.f32 1.0, %v660
        %v662 = vmul.f32 %v659, %v661
        %v663 = vadd.f32 %v659, %v662
        %vm664 = vweird.f32 %v560
        %vm665 = vweird.f32 %v659
        %vm666 = vmor %vm664, %vm665
        %v667 = vsel %vm666, %v659, %v663
        %v668 = vand.u32 2147483647, %v560
        %vm669 = vcmp.eq.f32.partialorder %v668, 8.507059e+37
        %v670 = vand.u32 %v560, 2147483648
        %v671 = vor.u32 1.1754944e-38, %v670
        %v672 = vsel %vm669, %v671, %v667
        %v673 = vmul.f32 %v507, %v574
        %v674 = vmul.f32 %v508, %v588
        %v675 = vmul.f32 %v509, %v602
        %v676 = vmul.f32 %v510, %v616
        %v677 = vmul.f32 %v511, %v630
        %v678 = vmul.f32 %v512, %v644
        %v679 = vmul.f32 %v513, %v658
        %v680 = vmul.f32 %v514, %v672
        %v681 = vlaneseq
        %v682 = vshrl.u32 %v681, 7
        %v683 = vlaneseq
        %v684 = vand.u32 %v683, 127
        %v685 = vadd.s32 %v684, 128
        %v686 = vadd.s32 %v684, 256
        %v687 = vadd.s32 %v684, 384
        %v688 = vadd.s32 %v684, 512
        %v689 = vadd.s32 %v684, 640
        %v690 = vadd.s32 %v684, 768
        %v691 = vadd.s32 %v684, 896
        %v692 = vstv %s331
        %vm693 = vcmp.lt.s32.totalorder %v682, %v692
        %vm694 = vcmp.lt.s32.totalorder %v684, 1000
        %vm695 = vcmp.lt.s32.totalorder %v685, 1000
        %vm696 = vcmp.lt.s32.totalorder %v686, 1000
        %vm697 = vcmp.lt.s32.totalorder %v687, 1000
        %vm698 = vcmp.lt.s32.totalorder %v688, 1000
        %vm699 = vcmp.lt.s32.totalorder %v689, 1000
        %vm700 = vcmp.lt.s32.totalorder %v690, 1000
        %vm701 = vcmp.lt.s32.totalorder %v691, 1000
        %vm702 = vmand %vm693, %vm694
        %vm703 = vmand %vm693, %vm695
        %vm704 = vmand %vm693, %vm696
        %vm705 = vmand %vm693, %vm697
        %vm706 = vmand %vm693, %vm698
        %vm707 = vmand %vm693, %vm699
        %vm708 = vmand %vm693, %vm700
        %vm709 = vmand %vm693, %vm701
        %v710 = vsel %vm702, %v673, -1.0
        %v711 = vsel %vm703, %v674, -1.0
        %v712 = vsel %vm704, %v675, -1.0
        %v713 = vsel %vm705, %v676, -1.0
        %v714 = vsel %vm706, %v677, -1.0
        %v715 = vsel %vm707, %v678, -1.0
        %v716 = vsel %vm708, %v679, -1.0
        %v717 = vsel %vm709, %v680, -1.0
        %v718 = vrot.slane %v710, 4
        %v719 = vmax.f32 %v710, %v718
        %v720 = vrot.slane %v719, 2
        %v721 = vmax.f32 %v719, %v720
        %v722 = vrot.slane %v721, 1
        %v723 = vmax.f32 %v721, %v722
        %v724 = vrot.slane %v711, 4
        %v725 = vmax.f32 %v711, %v724
        %v726 = vrot.slane %v725, 2
        %v727 = vmax.f32 %v725, %v726
        %v728 = vrot.slane %v727, 1
        %v729 = vmax.f32 %v727, %v728
        %v730 = vrot.slane %v712, 4
        %v731 = vmax.f32 %v712, %v730
        %v732 = vrot.slane %v731, 2
        %v733 = vmax.f32 %v731, %v732
        %v734 = vrot.slane %v733, 1
        %v735 = vmax.f32 %v733, %v734
        %v736 = vrot.slane %v713, 4
        %v737 = vmax.f32 %v713, %v736
        %v738 = vrot.slane %v737, 2
        %v739 = vmax.f32 %v737, %v738
        %v740 = vrot.slane %v739, 1
        %v741 = vmax.f32 %v739, %v740
        %v742 = vrot.slane %v714, 4
        %v743 = vmax.f32 %v714, %v742
        %v744 = vrot.slane %v743, 2
        %v745 = vmax.f32 %v743, %v744
        %v746 = vrot.slane %v745, 1
        %v747 = vmax.f32 %v745, %v746
        %v748 = vrot.slane %v715, 4
        %v749 = vmax.f32 %v715, %v748
        %v750 = vrot.slane %v749, 2
        %v751 = vmax.f32 %v749, %v750
        %v752 = vrot.slane %v751, 1
        %v753 = vmax.f32 %v751, %v752
        %v754 = vrot.slane %v716, 4
        %v755 = vmax.f32 %v716, %v754
        %v756 = vrot.slane %v755, 2
        %v757 = vmax.f32 %v755, %v756
        %v758 = vrot.slane %v757, 1
        %v759 = vmax.f32 %v757, %v758
        %v760 = vrot.slane %v717, 4
        %v761 = vmax.f32 %v717, %v760
        %v762 = vrot.slane %v761, 2
        %v763 = vmax.f32 %v761, %v762
        %v764 = vrot.slane %v763, 1
        %v765 = vmax.f32 %v763, %v764
        %vm766 = vcmp.eq.f32.partialorder %v710, %v723
        %vm767 = vcmp.eq.f32.partialorder %v711, %v729
        %vm768 = vcmp.eq.f32.partialorder %v712, %v735
        %vm769 = vcmp.eq.f32.partialorder %v713, %v741
        %vm770 = vcmp.eq.f32.partialorder %v714, %v747
        %vm771 = vcmp.eq.f32.partialorder %v715, %v753
        %vm772 = vcmp.eq.f32.partialorder %v716, %v759
        %vm773 = vcmp.eq.f32.partialorder %v717, %v765
        %v774 = vsel %vm766, %v682, 8
        %v775 = vsel %vm767, %v682, 8
        %v776 = vsel %vm768, %v682, 8
        %v777 = vsel %vm769, %v682, 8
        %v778 = vsel %vm770, %v682, 8
        %v779 = vsel %vm771, %v682, 8
        %v780 = vsel %vm772, %v682, 8
        %v781 = vsel %vm773, %v682, 8
        %v782 = vrot.slane %v774, 4
        %vm783 = vcmp.lt.s32.totalorder %v774, %v782
        %v784 = vsel %vm783, %v774, %v782
        %v785 = vrot.slane %v784, 2
        %vm786 = vcmp.lt.s32.totalorder %v784, %v785
        %v787 = vsel %vm786, %v784, %v785
        %v788 = vrot.slane %v787, 1
        %vm789 = vcmp.lt.s32.totalorder %v787, %v788
        %v790 = vsel %vm789, %v787, %v788
        %v791 = vrot.slane %v775, 4
        %vm792 = vcmp.lt.s32.totalorder %v775, %v791
        %v793 = vsel %vm792, %v775, %v791
        %v794 = vrot.slane %v793, 2
        %vm795 = vcmp.lt.s32.totalorder %v793, %v794
        %v796 = vsel %vm795, %v793, %v794
        %v797 = vrot.slane %v796, 1
        %vm798 = vcmp.lt.s32.totalorder %v796, %v797
        %v799 = vsel %vm798, %v796, %v797
        %v800 = vrot.slane %v776, 4
        %vm801 = vcmp.lt.s32.totalorder %v776, %v800
        %v802 = vsel %vm801, %v776, %v800
        %v803 = vrot.slane %v802, 2
        %vm804 = vcmp.lt.s32.totalorder %v802, %v803
        %v805 = vsel %vm804, %v802, %v803
        %v806 = vrot.slane %v805, 1
        %vm807 = vcmp.lt.s32.totalorder %v805, %v806
        %v808 = vsel %vm807, %v805, %v806
        %v809 = vrot.slane %v777, 4
        %vm810 = vcmp.lt.s32.totalorder %v777, %v809
        %v811 = vsel %vm810, %v777, %v809
        %v812 = vrot.slane %v811, 2
        %vm813 = vcmp.lt.s32.totalorder %v811, %v812
        %v814 = vsel %vm813, %v811, %v812
        %v815 = vrot.slane %v814, 1
        %vm816 = vcmp.lt.s32.totalorder %v814, %v815
        %v817 = vsel %vm816, %v814, %v815
        %v818 = vrot.slane %v778, 4
        %vm819 = vcmp.lt.s32.totalorder %v778, %v818
        %v820 = vsel %vm819, %v778, %v818
        %v821 = vrot.slane %v820, 2
        %vm822 = vcmp.lt.s32.totalorder %v820, %v821
        %v823 = vsel %vm822, %v820, %v821
        %v824 = vrot.slane %v823, 1
        %vm825 = vcmp.lt.s32.totalorder %v823, %v824
        %v826 = vsel %vm825, %v823, %v824
        %v827 = vrot.slane %v779, 4
        %vm828 = vcmp.lt.s32.totalorder %v779, %v827
        %v829 = vsel %vm828, %v779, %v827
        %v830 = vrot.slane %v829, 2
        %vm831 = vcmp.lt.s32.totalorder %v829, %v830
        %v832 = vsel %vm831, %v829, %v830
        %v833 = vrot.slane %v832, 1
        %vm834 = vcmp.lt.s32.totalorder %v832, %v833
        %v835 = vsel %vm834, %v832, %v833
        %v836 = vrot.slane %v780, 4
        %vm837 = vcmp.lt.s32.totalorder %v780, %v836
        %v838 = vsel %vm837, %v780, %v836
        %v839 = vrot.slane %v838, 2
        %vm840 = vcmp.lt.s32.totalorder %v838, %v839
        %v841 = vsel %vm840, %v838, %v839
        %v842 = vrot.slane %v841, 1
        %vm843 = vcmp.lt.s32.totalorder %v841, %v842
        %v844 = vsel %vm843, %v841, %v842
        %v845 = vrot.slane %v781, 4
        %vm846 = vcmp.lt.s32.totalorder %v781, %v845
        %v847 = vsel %vm846, %v781, %v845
        %v848 = vrot.slane %v847, 2
        %vm849 = vcmp.lt.s32.totalorder %v847, %v848
        %v850 = vsel %vm849, %v847, %v848
        %v851 = vrot.slane %v850, 1
        %vm852 = vcmp.lt.s32.totalorder %v850, %v851
        %v853 = vsel %vm852, %v850, %v851
        %v862 = vrot.slane %v729, 7
        %v863 = vrot.slane %v735, 6
        %v864 = vrot.slane %v741, 5
        %v865 = vrot.slane %v747, 4
        %v866 = vrot.slane %v753, 3
        %v867 = vrot.slane %v759, 2
        %v868 = vrot.slane %v765, 1
        %vm869 = vcmask 1040384
        %v870 = vsel %vm869, %v723, %v862
        %vm871 = vcmask 1042434
        %v872 = vsel %vm871, %v863, %v864
        %vm873 = vcmask 1041408
        %v874 = vsel %vm873, %v870, %v872
        %vm875 = vcmask 1044484
        %v876 = vsel %vm875, %v865, %v866
        %vm877 = vcmask 1046534
        %v878 = vsel %vm877, %v867, %v868
        %vm879 = vcmask 1045508
        %v880 = vsel %vm879, %v876, %v878
        %vm881 = vcmask 1043456
        %v882 = vsel %vm881, %v874, %v880
        %884 = vst [vmem:[%s312] sm:$0xff] %v882
        %v885 = vrot.slane %v799, 7
        %v886 = vrot.slane %v808, 6
        %v887 = vrot.slane %v817, 5
        %v888 = vrot.slane %v826, 4
        %v889 = vrot.slane %v835, 3
        %v890 = vrot.slane %v844, 2
        %v891 = vrot.slane %v853, 1
        %v892 = vsel %vm869, %v790, %v885
        %v893 = vsel %vm871, %v886, %v887
        %v894 = vsel %vm873, %v892, %v893
        %v895 = vsel %vm875, %v888, %v889
        %v896 = vsel %vm877, %v890, %v891
        %v897 = vsel %vm879, %v895, %v896
        %v898 = vsel %vm881, %v894, %v897
        %899 = vst [vmem:[%s305] sm:$0xff] %v898
        %v900 = vmax.f32 %v710, %v714
        %v901 = vmax.f32 %v711, %v715
        %v902 = vmax.f32 %v712, %v716
        %v903 = vmax.f32 %v713, %v717
        %v904 = vmax.f32 %v900, %v901
        %v905 = vmax.f32 %v902, %v903
        %v906 = vmax.f32 %v904, %v905
        %907 = vmax.xlane.f32.xlu0 %v906
        %v908 = vpop.xlane.xlu0 %907
        %vm909 = vcmp.eq.f32.partialorder %v710, %v908
        %vm910 = vcmp.eq.f32.partialorder %v711, %v908
        %vm911 = vcmp.eq.f32.partialorder %v712, %v908
        %vm912 = vcmp.eq.f32.partialorder %v713, %v908
        %vm913 = vcmp.eq.f32.partialorder %v714, %v908
        %vm914 = vcmp.eq.f32.partialorder %v715, %v908
        %vm915 = vcmp.eq.f32.partialorder %v716, %v908
        %vm916 = vcmp.eq.f32.partialorder %v717, %v908
        %vm917 = vmand %vm693, %vm909
        %vm918 = vmand %vm693, %vm910
        %vm919 = vmand %vm693, %vm911
        %vm920 = vmand %vm693, %vm912
        %vm921 = vmand %vm693, %vm913
        %vm922 = vmand %vm693, %vm914
        %vm923 = vmand %vm693, %vm915
        %vm924 = vmand %vm693, %vm916
        %v925 = vsel %vm917, 1, 0
        %v926 = vsel %vm918, 1, 0
        %v927 = vsel %vm919, 1, 0
        %v928 = vsel %vm920, 1, 0
        %v929 = vsel %vm921, 1, 0
        %v930 = vsel %vm922, 1, 0
        %v931 = vsel %vm923, 1, 0
        %v932 = vsel %vm924, 1, 0
        %v933 = vrot.slane %v925, 4
        %vm934 = vcmp.gt.s32.totalorder %v925, %v933
        %v935 = vsel %vm934, %v925, %v933
        %v936 = vrot.slane %v935, 2
        %vm937 = vcmp.gt.s32.totalorder %v935, %v936
        %v938 = vsel %vm937, %v935, %v936
        %v939 = vrot.slane %v938, 1
        %vm940 = vcmp.gt.s32.totalorder %v938, %v939
        %v941 = vsel %vm940, %v938, %v939
        %v942 = vrot.slane %v926, 4
        %vm943 = vcmp.gt.s32.totalorder %v926, %v942
        %v944 = vsel %vm943, %v926, %v942
        %v945 = vrot.slane %v944, 2
        %vm946 = vcmp.gt.s32.totalorder %v944, %v945
        %v947 = vsel %vm946, %v944, %v945
        %v948 = vrot.slane %v947, 1
        %vm949 = vcmp.gt.s32.totalorder %v947, %v948
        %v950 = vsel %vm949, %v947, %v948
        %v951 = vrot.slane %v927, 4
        %vm952 = vcmp.gt.s32.totalorder %v927, %v951
        %v953 = vsel %vm952, %v927, %v951
        %v954 = vrot.slane %v953, 2
        %vm955 = vcmp.gt.s32.totalorder %v953, %v954
        %v956 = vsel %vm955, %v953, %v954
        %v957 = vrot.slane %v956, 1
        %vm958 = vcmp.gt.s32.totalorder %v956, %v957
        %v959 = vsel %vm958, %v956, %v957
        %v960 = vrot.slane %v928, 4
        %vm961 = vcmp.gt.s32.totalorder %v928, %v960
        %v962 = vsel %vm961, %v928, %v960
        %v963 = vrot.slane %v962, 2
        %vm964 = vcmp.gt.s32.totalorder %v962, %v963
        %v965 = vsel %vm964, %v962, %v963
        %v966 = vrot.slane %v965, 1
        %vm967 = vcmp.gt.s32.totalorder %v965, %v966
        %v968 = vsel %vm967, %v965, %v966
        %v969 = vrot.slane %v929, 4
        %vm970 = vcmp.gt.s32.totalorder %v929, %v969
        %v971 = vsel %vm970, %v929, %v969
        %v972 = vrot.slane %v971, 2
        %vm973 = vcmp.gt.s32.totalorder %v971, %v972
        %v974 = vsel %vm973, %v971, %v972
        %v975 = vrot.slane %v974, 1
        %vm976 = vcmp.gt.s32.totalorder %v974, %v975
        %v977 = vsel %vm976, %v974, %v975
        %v978 = vrot.slane %v930, 4
        %vm979 = vcmp.gt.s32.totalorder %v930, %v978
        %v980 = vsel %vm979, %v930, %v978
        %v981 = vrot.slane %v980, 2
        %vm982 = vcmp.gt.s32.totalorder %v980, %v981
        %v983 = vsel %vm982, %v980, %v981
        %v984 = vrot.slane %v983, 1
        %vm985 = vcmp.gt.s32.totalorder %v983, %v984
        %v986 = vsel %vm985, %v983, %v984
        %v987 = vrot.slane %v931, 4
        %vm988 = vcmp.gt.s32.totalorder %v931, %v987
        %v989 = vsel %vm988, %v931, %v987
        %v990 = vrot.slane %v989, 2
        %vm991 = vcmp.gt.s32.totalorder %v989, %v990
        %v992 = vsel %vm991, %v989, %v990
        %v993 = vrot.slane %v992, 1
        %vm994 = vcmp.gt.s32.totalorder %v992, %v993
        %v995 = vsel %vm994, %v992, %v993
        %v996 = vrot.slane %v932, 4
        %vm997 = vcmp.gt.s32.totalorder %v932, %v996
        %v998 = vsel %vm997, %v932, %v996
        %v999 = vrot.slane %v998, 2
        %vm1000 = vcmp.gt.s32.totalorder %v998, %v999
        %v1001 = vsel %vm1000, %v998, %v999
        %v1002 = vrot.slane %v1001, 1
        %vm1003 = vcmp.gt.s32.totalorder %v1001, %v1002
        %v1004 = vsel %vm1003, %v1001, %v1002
        %vm1005 = vcmp.gt.s32.totalorder %v941, 0
        %vm1006 = vcmp.gt.s32.totalorder %v950, 0
        %vm1007 = vcmp.gt.s32.totalorder %v959, 0
        %vm1008 = vcmp.gt.s32.totalorder %v968, 0
        %vm1009 = vcmp.gt.s32.totalorder %v977, 0
        %vm1010 = vcmp.gt.s32.totalorder %v986, 0
        %vm1011 = vcmp.gt.s32.totalorder %v995, 0
        %vm1012 = vcmp.gt.s32.totalorder %v1004, 0
        %vm1013 = vcmp.lt.f32.partialorder %v723, 0.3
        %vm1014 = vcmp.lt.f32.partialorder %v729, 0.3
        %vm1015 = vcmp.lt.f32.partialorder %v735, 0.3
        %vm1016 = vcmp.lt.f32.partialorder %v741, 0.3
        %vm1017 = vcmp.lt.f32.partialorder %v747, 0.3
        %vm1018 = vcmp.lt.f32.partialorder %v753, 0.3
        %vm1019 = vcmp.lt.f32.partialorder %v759, 0.3
        %vm1020 = vcmp.lt.f32.partialorder %v765, 0.3
        %v1021 = vsel %vm1013, 0, 4294967295
        %v1022 = vsel %vm1014, 0, 4294967295
        %v1023 = vsel %vm1015, 0, 4294967295
        %v1024 = vsel %vm1016, 0, 4294967295
        %v1025 = vsel %vm1017, 0, 4294967295
        %v1026 = vsel %vm1018, 0, 4294967295
        %v1027 = vsel %vm1019, 0, 4294967295
        %v1028 = vsel %vm1020, 0, 4294967295
        %vm1029 = vcmp.ge.f32.partialorder %v723, 0.7
        %vm1030 = vcmp.ge.f32.partialorder %v729, 0.7
        %vm1031 = vcmp.ge.f32.partialorder %v735, 0.7
        %vm1032 = vcmp.ge.f32.partialorder %v741, 0.7
        %vm1033 = vcmp.ge.f32.partialorder %v747, 0.7
        %vm1034 = vcmp.ge.f32.partialorder %v753, 0.7
        %vm1035 = vcmp.ge.f32.partialorder %v759, 0.7
        %vm1036 = vcmp.ge.f32.partialorder %v765, 0.7
        %v1037 = vsel %vm1029, 1, %v1021
        %v1038 = vsel %vm1030, 1, %v1022
        %v1039 = vsel %vm1031, 1, %v1023
        %v1040 = vsel %vm1032, 1, %v1024
        %v1041 = vsel %vm1033, 1, %v1025
        %v1042 = vsel %vm1034, 1, %v1026
        %v1043 = vsel %vm1035, 1, %v1027
        %v1044 = vsel %vm1036, 1, %v1028
        %v1045 = vsel %vm1005, 1, %v1037
        %v1046 = vsel %vm1006, 1, %v1038
        %v1047 = vsel %vm1007, 1, %v1039
        %v1048 = vsel %vm1008, 1, %v1040
        %v1049 = vsel %vm1009, 1, %v1041
        %v1050 = vsel %vm1010, 1, %v1042
        %v1051 = vsel %vm1011, 1, %v1043
        %v1052 = vsel %vm1012, 1, %v1044
        %v1053 = vrot.slane %v1046, 7
        %v1054 = vrot.slane %v1047, 6
        %v1055 = vrot.slane %v1048, 5
        %v1056 = vrot.slane %v1049, 4
        %v1057 = vrot.slane %v1050, 3
        %v1058 = vrot.slane %v1051, 2
        %v1059 = vrot.slane %v1052, 1
        %v1060 = vsel %vm869, %v1045, %v1053
        %v1061 = vsel %vm871, %v1054, %v1055
        %v1062 = vsel %vm873, %v1060, %v1061
        %v1063 = vsel %vm875, %v1056, %v1057
        %v1064 = vsel %vm877, %v1058, %v1059
        %v1065 = vsel %vm879, %v1063, %v1064
        %v1066 = vsel %vm881, %v1062, %v1065
        %1067 = vst [vmem:[%s298] sm:$0xff] %v1066
        %v1068 = vsel %vm909, %v684, 1024
        %v1069 = vsel %vm910, %v685, 1024
        %v1070 = vsel %vm911, %v686, 1024
        %v1071 = vsel %vm912, %v687, 1024
        %v1072 = vsel %vm913, %v688, 1024
        %v1073 = vsel %vm914, %v689, 1024
        %v1074 = vsel %vm915, %v690, 1024
        %v1075 = vsel %vm916, %v691, 1024
        %vm1076 = vcmp.lt.s32.totalorder %v1068, %v1072
        %v1077 = vsel %vm1076, %v1068, %v1072
        %vm1078 = vcmp.lt.s32.totalorder %v1069, %v1073
        %v1079 = vsel %vm1078, %v1069, %v1073
        %vm1080 = vcmp.lt.s32.totalorder %v1070, %v1074
        %v1081 = vsel %vm1080, %v1070, %v1074
        %vm1082 = vcmp.lt.s32.totalorder %v1071, %v1075
        %v1083 = vsel %vm1082, %v1071, %v1075
        %vm1084 = vcmp.lt.s32.totalorder %v1077, %v1079
        %v1085 = vsel %vm1084, %v1077, %v1079
        %vm1086 = vcmp.lt.s32.totalorder %v1081, %v1083
        %v1087 = vsel %vm1086, %v1081, %v1083
        %vm1088 = vcmp.lt.s32.totalorder %v1085, %v1087
        %v1089 = vsel %vm1088, %v1085, %v1087
        %v1090 = vand.u32 %v1089, 65535
        %v1091 = vshra.s32 %v1089, 16
        %v1092 = vcvt.s32.f32 %v1090
        %v1093 = vcvt.s32.f32 %v1091
        %1094 = vmin.xlane.f32.xlu0 %v1093
        %v1095 = vpop.xlane.xlu0 %1094
        %vm1096 = vcmp.eq.f32.partialorder %v1093, %v1095
        %v1097 = vsel %vm1096, %v1092, inf
        %1098 = vmin.xlane.f32.xlu0 %v1097
        %v1099 = vpop.xlane.xlu0 %1098
        %v1100 = vcvt.f32.s32 %v1099
        %v1101 = vcvt.f32.s32 %v1095
        %v1102 = vshll.u32 %v1101, 16
        %v1103 = vadd.s32 %v1102, %v1100
        %vm1104 = vcmp.eq.s32.totalorder %v684, 0
        %v1105 = vsel %vm1104, %v908, -1.0
        %v1106 = vsel %vm1104, %v1103, 0
        %vm1107 = vcmp.eq.s32.totalorder %v684, %v1103
        %vm1108 = vcmp.eq.s32.totalorder %v685, %v1103
        %vm1109 = vcmp.eq.s32.totalorder %v686, %v1103
        %vm1110 = vcmp.eq.s32.totalorder %v687, %v1103
        %vm1111 = vcmp.eq.s32.totalorder %v688, %v1103
        %vm1112 = vcmp.eq.s32.totalorder %v689, %v1103
        %vm1113 = vcmp.eq.s32.totalorder %v690, %v1103
        %vm1114 = vcmp.eq.s32.totalorder %v691, %v1103
        %v1115 = vsel %vm1107, -2.0, %v710
        %v1116 = vsel %vm1108, -2.0, %v711
        %v1117 = vsel %vm1109, -2.0, %v712
        %v1118 = vsel %vm1110, -2.0, %v713
        %v1119 = vsel %vm1111, -2.0, %v714
        %v1120 = vsel %vm1112, -2.0, %v715
        %v1121 = vsel %vm1113, -2.0, %v716
        %v1122 = vsel %vm1114, -2.0, %v717
        %v1123 = vmax.f32 %v1115, %v1119
        %v1124 = vmax.f32 %v1116, %v1120
        %v1125 = vmax.f32 %v1117, %v1121
        %v1126 = vmax.f32 %v1118, %v1122
        %v1127 = vmax.f32 %v1123, %v1124
        %v1128 = vmax.f32 %v1125, %v1126
        %v1129 = vmax.f32 %v1127, %v1128
        %1130 = vmax.xlane.f32.xlu0 %v1129
        %v1131 = vpop.xlane.xlu0 %1130
        %vm1132 = vcmp.eq.f32.partialorder %v1115, %v1131
        %vm1133 = vcmp.eq.f32.partialorder %v1116, %v1131
        %vm1134 = vcmp.eq.f32.partialorder %v1117, %v1131
        %vm1135 = vcmp.eq.f32.partialorder %v1118, %v1131
        %vm1136 = vcmp.eq.f32.partialorder %v1119, %v1131
        %vm1137 = vcmp.eq.f32.partialorder %v1120, %v1131
        %vm1138 = vcmp.eq.f32.partialorder %v1121, %v1131
        %vm1139 = vcmp.eq.f32.partialorder %v1122, %v1131
        %v1140 = vsel %vm1132, %v684, 1024
        %v1141 = vsel %vm1133, %v685, 1024
        %v1142 = vsel %vm1134, %v686, 1024
        %v1143 = vsel %vm1135, %v687, 1024
        %v1144 = vsel %vm1136, %v688, 1024
        %v1145 = vsel %vm1137, %v689, 1024
        %v1146 = vsel %vm1138, %v690, 1024
        %v1147 = vsel %vm1139, %v691, 1024
        %vm1148 = vcmp.lt.s32.totalorder %v1140, %v1144
        %v1149 = vsel %vm1148, %v1140, %v1144
        %vm1150 = vcmp.lt.s32.totalorder %v1141, %v1145
        %v1151 = vsel %vm1150, %v1141, %v1145
        %vm1152 = vcmp.lt.s32.totalorder %v1142, %v1146
        %v1153 = vsel %vm1152, %v1142, %v1146
        %vm1154 = vcmp.lt.s32.totalorder %v1143, %v1147
        %v1155 = vsel %vm1154, %v1143, %v1147
        %vm1156 = vcmp.lt.s32.totalorder %v1149, %v1151
        %v1157 = vsel %vm1156, %v1149, %v1151
        %vm1158 = vcmp.lt.s32.totalorder %v1153, %v1155
        %v1159 = vsel %vm1158, %v1153, %v1155
        %vm1160 = vcmp.lt.s32.totalorder %v1157, %v1159
        %v1161 = vsel %vm1160, %v1157, %v1159
        %v1162 = vand.u32 %v1161, 65535
        %v1163 = vshra.s32 %v1161, 16
        %v1164 = vcvt.s32.f32 %v1162
        %v1165 = vcvt.s32.f32 %v1163
        %1166 = vmin.xlane.f32.xlu0 %v1165
        %v1167 = vpop.xlane.xlu0 %1166
        %vm1168 = vcmp.eq.f32.partialorder %v1165, %v1167
        %v1169 = vsel %vm1168, %v1164, inf
        %1170 = vmin.xlane.f32.xlu0 %v1169
        %v1171 = vpop.xlane.xlu0 %1170
        %v1172 = vcvt.f32.s32 %v1171
        %v1173 = vcvt.f32.s32 %v1167
        %v1174 = vshll.u32 %v1173, 16
        %v1175 = vadd.s32 %v1174, %v1172
        %vm1176 = vcmp.eq.s32.totalorder %v684, 1
        %v1177 = vsel %vm1176, %v1131, %v1105
        %v1178 = vsel %vm1176, %v1175, %v1106
        %vm1179 = vcmp.eq.s32.totalorder %v684, %v1175
        %vm1180 = vcmp.eq.s32.totalorder %v685, %v1175
        %vm1181 = vcmp.eq.s32.totalorder %v686, %v1175
        %vm1182 = vcmp.eq.s32.totalorder %v687, %v1175
        %vm1183 = vcmp.eq.s32.totalorder %v688, %v1175
        %vm1184 = vcmp.eq.s32.totalorder %v689, %v1175
        %vm1185 = vcmp.eq.s32.totalorder %v690, %v1175
        %vm1186 = vcmp.eq.s32.totalorder %v691, %v1175
        %v1187 = vsel %vm1179, -2.0, %v1115
        %v1188 = vsel %vm1180, -2.0, %v1116
        %v1189 = vsel %vm1181, -2.0, %v1117
        %v1190 = vsel %vm1182, -2.0, %v1118
        %v1191 = vsel %vm1183, -2.0, %v1119
        %v1192 = vsel %vm1184, -2.0, %v1120
        %v1193 = vsel %vm1185, -2.0, %v1121
        %v1194 = vsel %vm1186, -2.0, %v1122
        %v1195 = vmax.f32 %v1187, %v1191
        %v1196 = vmax.f32 %v1188, %v1192
        %v1197 = vmax.f32 %v1189, %v1193
        %v1198 = vmax.f32 %v1190, %v1194
        %v1199 = vmax.f32 %v1195, %v1196
        %v1200 = vmax.f32 %v1197, %v1198
        %v1201 = vmax.f32 %v1199, %v1200
        %1202 = vmax.xlane.f32.xlu0 %v1201
        %v1203 = vpop.xlane.xlu0 %1202
        %vm1204 = vcmp.eq.f32.partialorder %v1187, %v1203
        %vm1205 = vcmp.eq.f32.partialorder %v1188, %v1203
        %vm1206 = vcmp.eq.f32.partialorder %v1189, %v1203
        %vm1207 = vcmp.eq.f32.partialorder %v1190, %v1203
        %vm1208 = vcmp.eq.f32.partialorder %v1191, %v1203
        %vm1209 = vcmp.eq.f32.partialorder %v1192, %v1203
        %vm1210 = vcmp.eq.f32.partialorder %v1193, %v1203
        %vm1211 = vcmp.eq.f32.partialorder %v1194, %v1203
        %v1212 = vsel %vm1204, %v684, 1024
        %v1213 = vsel %vm1205, %v685, 1024
        %v1214 = vsel %vm1206, %v686, 1024
        %v1215 = vsel %vm1207, %v687, 1024
        %v1216 = vsel %vm1208, %v688, 1024
        %v1217 = vsel %vm1209, %v689, 1024
        %v1218 = vsel %vm1210, %v690, 1024
        %v1219 = vsel %vm1211, %v691, 1024
        %vm1220 = vcmp.lt.s32.totalorder %v1212, %v1216
        %v1221 = vsel %vm1220, %v1212, %v1216
        %vm1222 = vcmp.lt.s32.totalorder %v1213, %v1217
        %v1223 = vsel %vm1222, %v1213, %v1217
        %vm1224 = vcmp.lt.s32.totalorder %v1214, %v1218
        %v1225 = vsel %vm1224, %v1214, %v1218
        %vm1226 = vcmp.lt.s32.totalorder %v1215, %v1219
        %v1227 = vsel %vm1226, %v1215, %v1219
        %vm1228 = vcmp.lt.s32.totalorder %v1221, %v1223
        %v1229 = vsel %vm1228, %v1221, %v1223
        %vm1230 = vcmp.lt.s32.totalorder %v1225, %v1227
        %v1231 = vsel %vm1230, %v1225, %v1227
        %vm1232 = vcmp.lt.s32.totalorder %v1229, %v1231
        %v1233 = vsel %vm1232, %v1229, %v1231
        %v1234 = vand.u32 %v1233, 65535
        %v1235 = vshra.s32 %v1233, 16
        %v1236 = vcvt.s32.f32 %v1234
        %v1237 = vcvt.s32.f32 %v1235
        %1238 = vmin.xlane.f32.xlu0 %v1237
        %v1239 = vpop.xlane.xlu0 %1238
        %vm1240 = vcmp.eq.f32.partialorder %v1237, %v1239
        %v1241 = vsel %vm1240, %v1236, inf
        %1242 = vmin.xlane.f32.xlu0 %v1241
        %v1243 = vpop.xlane.xlu0 %1242
        %v1244 = vcvt.f32.s32 %v1243
        %v1245 = vcvt.f32.s32 %v1239
        %v1246 = vshll.u32 %v1245, 16
        %v1247 = vadd.s32 %v1246, %v1244
        %vm1248 = vcmp.eq.s32.totalorder %v684, 2
        %v1249 = vsel %vm1248, %v1203, %v1177
        %v1250 = vsel %vm1248, %v1247, %v1178
        %vm1251 = vcmp.eq.s32.totalorder %v684, %v1247
        %vm1252 = vcmp.eq.s32.totalorder %v685, %v1247
        %vm1253 = vcmp.eq.s32.totalorder %v686, %v1247
        %vm1254 = vcmp.eq.s32.totalorder %v687, %v1247
        %vm1255 = vcmp.eq.s32.totalorder %v688, %v1247
        %vm1256 = vcmp.eq.s32.totalorder %v689, %v1247
        %vm1257 = vcmp.eq.s32.totalorder %v690, %v1247
        %vm1258 = vcmp.eq.s32.totalorder %v691, %v1247
        %v1259 = vsel %vm1251, -2.0, %v1187
        %v1260 = vsel %vm1252, -2.0, %v1188
        %v1261 = vsel %vm1253, -2.0, %v1189
        %v1262 = vsel %vm1254, -2.0, %v1190
        %v1263 = vsel %vm1255, -2.0, %v1191
        %v1264 = vsel %vm1256, -2.0, %v1192
        %v1265 = vsel %vm1257, -2.0, %v1193
        %v1266 = vsel %vm1258, -2.0, %v1194
        %v1267 = vmax.f32 %v1259, %v1263
        %v1268 = vmax.f32 %v1260, %v1264
        %v1269 = vmax.f32 %v1261, %v1265
        %v1270 = vmax.f32 %v1262, %v1266
        %v1271 = vmax.f32 %v1267, %v1268
        %v1272 = vmax.f32 %v1269, %v1270
        %v1273 = vmax.f32 %v1271, %v1272
        %1274 = vmax.xlane.f32.xlu0 %v1273
        %v1275 = vpop.xlane.xlu0 %1274
        %vm1276 = vcmp.eq.f32.partialorder %v1259, %v1275
        %vm1277 = vcmp.eq.f32.partialorder %v1260, %v1275
        %vm1278 = vcmp.eq.f32.partialorder %v1261, %v1275
        %vm1279 = vcmp.eq.f32.partialorder %v1262, %v1275
        %vm1280 = vcmp.eq.f32.partialorder %v1263, %v1275
        %vm1281 = vcmp.eq.f32.partialorder %v1264, %v1275
        %vm1282 = vcmp.eq.f32.partialorder %v1265, %v1275
        %vm1283 = vcmp.eq.f32.partialorder %v1266, %v1275
        %v1284 = vsel %vm1276, %v684, 1024
        %v1285 = vsel %vm1277, %v685, 1024
        %v1286 = vsel %vm1278, %v686, 1024
        %v1287 = vsel %vm1279, %v687, 1024
        %v1288 = vsel %vm1280, %v688, 1024
        %v1289 = vsel %vm1281, %v689, 1024
        %v1290 = vsel %vm1282, %v690, 1024
        %v1291 = vsel %vm1283, %v691, 1024
        %vm1292 = vcmp.lt.s32.totalorder %v1284, %v1288
        %v1293 = vsel %vm1292, %v1284, %v1288
        %vm1294 = vcmp.lt.s32.totalorder %v1285, %v1289
        %v1295 = vsel %vm1294, %v1285, %v1289
        %vm1296 = vcmp.lt.s32.totalorder %v1286, %v1290
        %v1297 = vsel %vm1296, %v1286, %v1290
        %vm1298 = vcmp.lt.s32.totalorder %v1287, %v1291
        %v1299 = vsel %vm1298, %v1287, %v1291
        %vm1300 = vcmp.lt.s32.totalorder %v1293, %v1295
        %v1301 = vsel %vm1300, %v1293, %v1295
        %vm1302 = vcmp.lt.s32.totalorder %v1297, %v1299
        %v1303 = vsel %vm1302, %v1297, %v1299
        %vm1304 = vcmp.lt.s32.totalorder %v1301, %v1303
        %v1305 = vsel %vm1304, %v1301, %v1303
        %v1306 = vand.u32 %v1305, 65535
        %v1307 = vshra.s32 %v1305, 16
        %v1308 = vcvt.s32.f32 %v1306
        %v1309 = vcvt.s32.f32 %v1307
        %1310 = vmin.xlane.f32.xlu0 %v1309
        %v1311 = vpop.xlane.xlu0 %1310
        %vm1312 = vcmp.eq.f32.partialorder %v1309, %v1311
        %v1313 = vsel %vm1312, %v1308, inf
        %1314 = vmin.xlane.f32.xlu0 %v1313
        %v1315 = vpop.xlane.xlu0 %1314
        %v1316 = vcvt.f32.s32 %v1315
        %v1317 = vcvt.f32.s32 %v1311
        %v1318 = vshll.u32 %v1317, 16
        %v1319 = vadd.s32 %v1318, %v1316
        %vm1320 = vcmp.eq.s32.totalorder %v684, 3
        %v1321 = vsel %vm1320, %v1275, %v1249
        %v1322 = vsel %vm1320, %v1319, %v1250
        %1323 = vst [vmem:[%s319] sm:$0xff] %v1321
        %1324 = vst [vmem:[%s326] sm:$0xff] %v1322
        %s1325 = sand.u32 %s99, 1
        %s1326 = scalar_lea.sflag [#allocation6], %s1325
        %s1327 = sand.u32 %s99, 1
        %s1328 = smul.addr %s1327, 8
        %s1329 = scalar_lea.vmem [#allocation7], %s1328
        %s1330 = sand.u32 %s39, 1
        %s1331 = scalar_lea.sflag [#allocation9], %s1330
        %s1332 = sand.u32 %s125, 1
        %s1333 = smul.addr %s1332, 8
        %s1334 = scalar_lea.vmem [#allocation8], %s1333
        %s1335 = sand.u32 %s39, 1
        %s1336 = scalar_lea.sflag [#allocation9], %s1335
        %s1337 = sand.u32 %s151, 1
        %s1338 = smul.addr %s1337, 8
        %s1339 = scalar_lea.vmem [#allocation10], %s1338
        %s1340 = sand.u32 %s39, 1
        %s1341 = scalar_lea.sflag [#allocation12], %s1340
        %s1342 = sand.u32 %s177, 1
        %s1343 = smul.addr %s1342, 8
        %s1344 = scalar_lea.vmem [#allocation11], %s1343
        %s1345 = sand.u32 %s39, 1
        %s1346 = scalar_lea.sflag [#allocation12], %s1345
        %s1347 = sand.u32 %s203, 1
        %s1348 = smul.addr %s1347, 8
        %s1349 = scalar_lea.vmem [#allocation13], %s1348
        // Predicated region
        $region33: #{stage1_match_batched.1} parent=27 // pred_check
          %p1350 = pneg %p109
        $region34: #{stage1_match_batched.1} parent=27 // pred_check_branch
          %1352 = sbr.rel (%p1350) target = $region36
        $region35: #{stage1_match_batched.1} parent=27 // pred_region
          %1354 = vsyncadd %s1326, 0
          %s1355 = smul.addr %s39, 8
          %s1356 = scalar_lea.hbm %s3, %s1355
          %s1358 = sshll.u32 %s1329, 4
          %s1359 = int_to_ptr.vmem [resolvable:$true] %s1358
          %s1360 = sshll.u32 %s1356, 4
          %s1361 = int_to_ptr.hbm [resolvable:$true] %s1360
          %1363 = dma.vmem_to_hbm [thread:$0]  %s1359, 128, %s1361, %s1326
        $region36: #{stage1_match_batched.1} parent=27 // pred_fallthru
          _
        // Predicated region
        $region37: #{stage1_match_batched.1} parent=27 // pred_check
          %p1364 = pneg %p135
        $region38: #{stage1_match_batched.1} parent=27 // pred_check_branch
          %1366 = sbr.rel (%p1364) target = $region40
        $region39: #{stage1_match_batched.1} parent=27 // pred_region
          %1368 = vsyncadd %s1331, 0
          %s1369 = smul.addr %s39, 8
          %s1370 = scalar_lea.hbm %s4, %s1369
          %s1372 = sshll.u32 %s1334, 4
          %s1373 = int_to_ptr.vmem [resolvable:$true] %s1372
          %s1374 = sshll.u32 %s1370, 4
          %s1375 = int_to_ptr.hbm [resolvable:$true] %s1374
          %1377 = dma.vmem_to_hbm [thread:$0]  %s1373, 128, %s1375, %s1331
        $region40: #{stage1_match_batched.1} parent=27 // pred_fallthru
          _
        // Predicated region
        $region41: #{stage1_match_batched.1} parent=27 // pred_check
          %p1378 = pneg %p161
        $region42: #{stage1_match_batched.1} parent=27 // pred_check_branch
          %1380 = sbr.rel (%p1378) target = $region44
        $region43: #{stage1_match_batched.1} parent=27 // pred_region
          %1382 = vsyncadd %s1336, 0
          %s1383 = smul.addr %s39, 8
          %s1384 = scalar_lea.hbm %s5, %s1383
          %s1386 = sshll.u32 %s1339, 4
          %s1387 = int_to_ptr.vmem [resolvable:$true] %s1386
          %s1388 = sshll.u32 %s1384, 4
          %s1389 = int_to_ptr.hbm [resolvable:$true] %s1388
          %1391 = dma.vmem_to_hbm [thread:$0]  %s1387, 128, %s1389, %s1336
        $region44: #{stage1_match_batched.1} parent=27 // pred_fallthru
          _
        // Predicated region
        $region45: #{stage1_match_batched.1} parent=27 // pred_check
          %p1392 = pneg %p187
        $region46: #{stage1_match_batched.1} parent=27 // pred_check_branch
          %1394 = sbr.rel (%p1392) target = $region48
        $region47: #{stage1_match_batched.1} parent=27 // pred_region
          %1396 = vsyncadd %s1341, 0
          %s1397 = smul.addr %s39, 8
          %s1398 = scalar_lea.hbm %s6, %s1397
          %s1400 = sshll.u32 %s1344, 4
          %s1401 = int_to_ptr.vmem [resolvable:$true] %s1400
          %s1402 = sshll.u32 %s1398, 4
          %s1403 = int_to_ptr.hbm [resolvable:$true] %s1402
          %1405 = dma.vmem_to_hbm [thread:$0]  %s1401, 128, %s1403, %s1341
        $region48: #{stage1_match_batched.1} parent=27 // pred_fallthru
          _
        // Predicated region
        $region49: #{stage1_match_batched.1} parent=27 // pred_check
          %p1406 = pneg %p213
        $region50: #{stage1_match_batched.1} parent=27 // pred_check_branch
          %1408 = sbr.rel (%p1406) target = $region52
        $region51: #{stage1_match_batched.1} parent=27 // pred_region
          %1410 = vsyncadd %s1346, 0
          %s1411 = smul.addr %s39, 8
          %s1412 = scalar_lea.hbm %s7, %s1411
          %s1414 = sshll.u32 %s1349, 4
          %s1415 = int_to_ptr.vmem [resolvable:$true] %s1414
          %s1416 = sshll.u32 %s1412, 4
          %s1417 = int_to_ptr.hbm [resolvable:$true] %s1416
          %1419 = dma.vmem_to_hbm [thread:$0]  %s1415, 128, %s1417, %s1346
        $region52: #{stage1_match_batched.1} parent=27 // pred_fallthru
          _
      $region28: #{stage1_match_batched.1} parent=5 // pred_fallthru
        _
      %p1420 = scmp.le.s32.totalorder 2, %s34
      // Predicated region
      $region53: #{stage1_match_batched.1} parent=5 // pred_check
        %p1421 = pneg %p1420
      $region54: #{stage1_match_batched.1} parent=5 // pred_check_branch
        %1423 = sbr.rel (%p1421) target = $region56
      $region55: #{stage1_match_batched.1} parent=5 // pred_region
        %s1424 = ssub.s32 %s34, 2
        // Predicated region
        $region57: #{stage1_match_batched.1} parent=55 // pred_check
          %p1425 = pneg %p115
        $region58: #{stage1_match_batched.1} parent=55 // pred_check_branch
          %1427 = sbr.rel (%p1425) target = $region60
        $region59: #{stage1_match_batched.1} parent=55 // pred_region
          %s1428 = sand.u32 %s100, 1
          %s1429 = scalar_lea.sflag [#allocation6], %s1428
          %s1430 = sand.u32 %s100, 1
          %s1431 = smul.addr %s1430, 8
          %s1432 = scalar_lea.vmem [#allocation7], %s1431
          %1434 = dma.done %s1429, 128
        $region60: #{stage1_match_batched.1} parent=55 // pred_fallthru
          _
        // Predicated region
        $region61: #{stage1_match_batched.1} parent=55 // pred_check
          %p1435 = pneg %p141
        $region62: #{stage1_match_batched.1} parent=55 // pred_check_branch
          %1437 = sbr.rel (%p1435) target = $region64
        $region63: #{stage1_match_batched.1} parent=55 // pred_region
          %s1438 = sand.u32 %s40, 1
          %s1439 = scalar_lea.sflag [#allocation9], %s1438
          %s1440 = sand.u32 %s126, 1
          %s1441 = smul.addr %s1440, 8
          %s1442 = scalar_lea.vmem [#allocation8], %s1441
          %1444 = dma.done %s1439, 128
        $region64: #{stage1_match_batched.1} parent=55 // pred_fallthru
          _
        // Predicated region
        $region65: #{stage1_match_batched.1} parent=55 // pred_check
          %p1445 = pneg %p167
        $region66: #{stage1_match_batched.1} parent=55 // pred_check_branch
          %1447 = sbr.rel (%p1445) target = $region68
        $region67: #{stage1_match_batched.1} parent=55 // pred_region
          %s1448 = sand.u32 %s40, 1
          %s1449 = scalar_lea.sflag [#allocation9], %s1448
          %s1450 = sand.u32 %s152, 1
          %s1451 = smul.addr %s1450, 8
          %s1452 = scalar_lea.vmem [#allocation10], %s1451
          %1454 = dma.done %s1449, 128
        $region68: #{stage1_match_batched.1} parent=55 // pred_fallthru
          _
        // Predicated region
        $region69: #{stage1_match_batched.1} parent=55 // pred_check
          %p1455 = pneg %p193
        $region70: #{stage1_match_batched.1} parent=55 // pred_check_branch
          %1457 = sbr.rel (%p1455) target = $region72
        $region71: #{stage1_match_batched.1} parent=55 // pred_region
          %s1458 = sand.u32 %s40, 1
          %s1459 = scalar_lea.sflag [#allocation12], %s1458
          %s1460 = sand.u32 %s178, 1
          %s1461 = smul.addr %s1460, 8
          %s1462 = scalar_lea.vmem [#allocation11], %s1461
          %1464 = dma.done %s1459, 128
        $region72: #{stage1_match_batched.1} parent=55 // pred_fallthru
          _
        // Predicated region
        $region73: #{stage1_match_batched.1} parent=55 // pred_check
          %p1465 = pneg %p219
        $region74: #{stage1_match_batched.1} parent=55 // pred_check_branch
          %1467 = sbr.rel (%p1465) target = $region76
        $region75: #{stage1_match_batched.1} parent=55 // pred_region
          %s1468 = sand.u32 %s40, 1
          %s1469 = scalar_lea.sflag [#allocation12], %s1468
          %s1470 = sand.u32 %s204, 1
          %s1471 = smul.addr %s1470, 8
          %s1472 = scalar_lea.vmem [#allocation13], %s1471
          %1474 = dma.done %s1469, 128
        $region76: #{stage1_match_batched.1} parent=55 // pred_fallthru
          _
      $region56: #{stage1_match_batched.1} parent=5 // pred_fallthru
        _
    $region6: #{stage1_match_batched.1} parent=1 // loop_footer
      %s38 = sadd.s32 1, %s34
    $region7: #{stage1_match_batched.1} parent=1 // loop_footer_branch
      %33 = sbr.rel target = $region3
    $region8: #{stage1_match_batched.1} parent=1 // loop_exit
      _
    %1475 = vsyncpa [#allocation5], 1
    %s1476 = scalar_lea.sflag [#allocation5], 1
    %1477 = vsyncpa %s1476, 1
    %1478 = vsyncpa [#allocation6], 1
    %s1479 = scalar_lea.sflag [#allocation6], 1
    %1480 = vsyncpa %s1479, 1
    %1481 = vsyncpa [#allocation9], 1
    %s1482 = scalar_lea.sflag [#allocation9], 1
    %1483 = vsyncpa %s1482, 1
    %1484 = vsyncpa [#allocation12], 1
    %s1485 = scalar_lea.sflag [#allocation12], 1
    %1486 = vsyncpa %s1485, 1

</llo_original>
